<compile_context>
chip_gen: v5e
topology: v5e:2x2
jax: 0.10.0
libtpu: 0.0.40
codegen_flags: <defaults>
</compile_context>

<pallas_src>
import functools

import jax
import jax.numpy as jnp
from jax import lax
from jax.experimental import pallas as pl
from jax.experimental.pallas import tpu as pltpu


def _round_up(x, m):
    return ((x + m - 1) // m) * m


# ---------------------------------------------------------------------------
# Kernel
# ---------------------------------------------------------------------------
def _residual_kernel(x_ref, w1_ref, b1_ref, w2_ref, b2_ref, m_ref, *rest,
                     has_proj, W, pad):
    """Fused ResidualBlock forward for a block of batch elements.

    Layout: channels on sublanes, flattened pixels of the packed batch block
    (N_b * H * W) on lanes.  xpad / hpad are flat zero-padded VMEM scratches
    (halo of `pad` lanes on each side); pscr is the shared im2col patch matrix.
    """
    if has_proj:
        ws_ref, bs_ref, o_ref, xpad, hpad, pscr = rest
    else:
        o_ref, xpad, hpad, pscr = rest

    n_b, cin, hw = x_ref.shape
    cout = b1_ref.shape[0]
    nbhw = n_b * hw
    k1, k2 = 9 * cin, 9 * cout
    k1p, k2p = w1_ref.shape[1], w2_ref.shape[1]

    # --- zero only the halo stripes (interior is overwritten below) and the
    #     sublane-pack padding rows of the patch scratch.
    xpad[:, :pad] = jnp.zeros((cin, pad), xpad.dtype)
    xpad[:, pad + nbhw:2 * pad + nbhw] = jnp.zeros((cin, pad), xpad.dtype)
    hpad[:, :pad] = jnp.zeros((cout, pad), hpad.dtype)
    hpad[:, pad + nbhw:2 * pad + nbhw] = jnp.zeros((cout, pad), hpad.dtype)
    for lo, hi in sorted({(k1, k1p), (k2, k2p)}):
        if hi > lo:
            pscr[lo:hi, :] = jnp.zeros((hi - lo, nbhw), pscr.dtype)

    # --- stage the f32 input block into the bf16 padded scratch (lane-aligned interior).
    for b in range(n_b):
        xpad[:, pad + b * hw:pad + (b + 1) * hw] = x_ref[b].astype(xpad.dtype)

    # Per-tap boundary masks (column wrap + row leakage across concatenated images).
    masks = [None if t == 4 else m_ref[t] for t in range(9)]      # (1, nbhw) bf16

    def im2col(src, c):
        """Store the 9 shifted+masked taps of `src` at sublane offsets t*c in pscr."""
        for t in range(9):
            dy, dx = t // 3, t % 3
            off = (dy - 1) * W + (dx - 1)
            win = src[:, pad + off:pad + off + nbhw]              # (c, nbhw) bf16
            if t != 4:
                win = win * masks[t]
            pscr[t * c:(t + 1) * c, :] = win

    # conv1 (3x3, BN1 scale pre-folded into the weights) -> +bias -> ReLU.
    im2col(xpad, cin)
    h = jnp.dot(w1_ref[...], pscr[:k1p, :], preferred_element_type=jnp.float32)
    h = jnp.maximum(h + b1_ref[...], 0.0)                         # f32 epilogue

    # Stage h, zero-padded, in VMEM (no HBM round trip between the two convs).
    hpad[:, pad:pad + nbhw] = h.astype(hpad.dtype)

    # conv2 (3x3, BN2 scale pre-folded) -> +bias.
    im2col(hpad, cout)
    out = jnp.dot(w2_ref[...], pscr[:k2p, :], preferred_element_type=jnp.float32)
    out = out + b2_ref[...]

    if has_proj:
        # 1x1 projection shortcut + BN: one matmul over the packed pixel axis.
        xin = xpad[:, pad:pad + nbhw]                             # (cin, nbhw) bf16
        out = out + jnp.dot(ws_ref[...], xin,
                            preferred_element_type=jnp.float32) + bs_ref[...]
        for b in range(n_b):
            o_ref[b] = jnp.maximum(out[:, b * hw:(b + 1) * hw], 0.0)
    else:
        # Identity shortcut: added in full f32 straight from the input block.
        for b in range(n_b):
            o_ref[b] = jnp.maximum(out[:, b * hw:(b + 1) * hw] + x_ref[b], 0.0)


# ---------------------------------------------------------------------------
# Wrapper
# ---------------------------------------------------------------------------
def residual_block(x_nchw, params, batch_block=None):
    """Forward pass of ResidualBlock (stride=1). Input/output are NCHW f32."""
    N, Cin, H, W = x_nchw.shape
    HW = H * W
    Cout = params["b1"].shape[0]
    has_proj = params["ws"] is not None
    assert has_proj or Cin == Cout, "identity shortcut requires Cin == Cout"

    if batch_block is None:
        # Pack the batch into few fat grid steps, but keep >= 2 "parallel" steps so
        # both TensorCores of a v7x chip get work (single-TC v5e/v6e don't care).
        batch_block = max(1, N // 2)
    assert N % batch_block == 0
    n_steps = N // batch_block
    NBHW = batch_block * HW

    pad = _round_up(W + 1, 128)              # lane-aligned halo, always >= W + 1

    # NCHW -> (N, C, H*W): pure reshape, stays f32 (cast to bf16 inside the kernel).
    x = x_nchw.reshape(N, Cin, HW)

    # Per-tap boundary masks over the packed pixel axis: kill column wrap-around and
    # row leakage across the batch images concatenated along the flat pixel axis.
    q = jnp.arange(NBHW, dtype=jnp.int32)
    p = q % HW
    row, col = p // W, p % W
    tap_masks = []
    for dy in range(3):
        for dx in range(3):
            m = jnp.ones((NBHW,), jnp.float32)
            if dy == 0:
                m = m * (row != 0)
            if dy == 2:
                m = m * (row != H - 1)
            if dx == 0:
                m = m * (col != 0)
            if dx == 2:
                m = m * (col != W - 1)
            tap_masks.append(m)
    masks = jnp.stack(tap_masks).reshape(9, 1, NBHW).astype(jnp.bfloat16)

    inputs = [x, params["w1"], params["b1"], params["w2"], params["b2"], masks]
    if has_proj:
        inputs += [params["ws"], params["bs"]]

    def whole(a):  # whole-array block, resident across the batch grid
        return pl.BlockSpec(a.shape, lambda i, _nd=a.ndim: (0,) * _nd)

    in_specs = [pl.BlockSpec((batch_block, Cin, HW), lambda i: (i, 0, 0))]
    in_specs += [whole(a) for a in inputs[1:]]

    K1p = params["w1"].shape[1]
    K2p = params["w2"].shape[1]

    kernel = functools.partial(_residual_kernel, has_proj=has_proj, W=W, pad=pad)

    out = pl.pallas_call(
        kernel,
        grid=(n_steps,),
        in_specs=in_specs,
        out_specs=pl.BlockSpec((batch_block, Cout, HW), lambda i: (i, 0, 0)),
        out_shape=jax.ShapeDtypeStruct((N, Cout, HW), jnp.float32),
        scratch_shapes=[
            pltpu.VMEM((Cin, NBHW + 2 * pad), jnp.bfloat16),     # zero-padded x block
            pltpu.VMEM((Cout, NBHW + 2 * pad), jnp.bfloat16),    # zero-padded h (VMEM only)
            pltpu.VMEM((max(K1p, K2p), NBHW), jnp.bfloat16),     # shared im2col patch matrix
        ],
        compiler_params=pltpu.CompilerParams(
            dimension_semantics=("parallel",),                   # megacore-shard the batch
            vmem_limit_bytes=32 * 1024 * 1024,                   # far above the few-hundred-KiB need
        ),
    )(*inputs)

    return out.reshape(N, Cout, H, W)                            # already NCHW


# ---------------------------------------------------------------------------
# Parameters (raw module params + folding/pre-layout for the kernel)
# ---------------------------------------------------------------------------
def make_raw_params(key, in_channels, out_channels):
    """Raw module parameters: HWIO conv weights + eval-mode BatchNorm statistics."""
    ks = jax.random.split(key, 6)

    def bn(k):
        k1, k2, k3, k4 = jax.random.split(k, 4)
        gamma = 1.0 + 0.1 * jax.random.normal(k1, (out_channels,), jnp.float32)
        beta = 0.1 * jax.random.normal(k2, (out_channels,), jnp.float32)
        mean = 0.1 * jax.random.normal(k3, (out_channels,), jnp.float32)
        var = 0.5 + jnp.abs(jax.random.normal(k4, (out_channels,), jnp.float32))
        return gamma, beta, mean, var

    raw = dict(
        w1=0.1 * jax.random.normal(ks[0], (3, 3, in_channels, out_channels), jnp.float32),
        w2=0.1 * jax.random.normal(ks[1], (3, 3, out_channels, out_channels), jnp.float32),
        bn1=bn(ks[2]),
        bn2=bn(ks[3]),
    )
    if in_channels != out_channels:
        raw["ws"] = 0.1 * jax.random.normal(ks[4], (in_channels, out_channels), jnp.float32)
        raw["bns"] = bn(ks[5])
    else:
        raw["ws"], raw["bns"] = None, None                       # identity shortcut
    return raw


def prepare_params(raw, eps=1e-5):
    """Fold eval-mode BN into conv weights (scale) + per-channel bias, and lay each 3x3
    weight out as (Cout, round_up(9*Cin, 16)) bf16 (zero-padded K) so the im2col matmul
    operands are aligned to the bf16 sublane pack."""
    def fold(bn):
        gamma, beta, mean, var = bn
        scale = gamma / jnp.sqrt(var + eps)
        return scale, beta - mean * scale

    s1, b1 = fold(raw["bn1"])
    s2, b2 = fold(raw["bn2"])
    cout = s1.shape[0]

    def conv_weight(w_hwio, scale):
        w = w_hwio * scale                                       # fold BN scale (per Cout)
        w = jnp.transpose(w, (3, 0, 1, 2)).reshape(cout, -1)     # (Cout, 9*Cin), tap-major
        k = w.shape[1]
        w = jnp.pad(w, ((0, 0), (0, _round_up(k, 16) - k)))      # zero-pad K to sublane pack
        return w.astype(jnp.bfloat16)

    params = dict(
        w1=conv_weight(raw["w1"], s1), b1=b1.reshape(cout, 1).astype(jnp.float32),
        w2=conv_weight(raw["w2"], s2), b2=b2.reshape(cout, 1).astype(jnp.float32),
    )
    if raw["ws"] is not None:
        ss, bs = fold(raw["bns"])
        params["ws"] = (raw["ws"] * ss).T.astype(jnp.bfloat16)   # (Cout, Cin)
        params["bs"] = bs.reshape(cout, 1).astype(jnp.float32)
    else:
        params["ws"], params["bs"] = None, None                  # identity: no 1x1 matmul
    return params


# ---------------------------------------------------------------------------
# Pure-JAX f32 reference (original module semantics, eval-mode BN)
# ---------------------------------------------------------------------------
def ref_residual_block(x_nchw, raw, eps=1e-5):
    def bn(y, p):
        gamma, beta, mean, var = p
        return (y - mean) / jnp.sqrt(var + eps) * gamma + beta

    x = jnp.transpose(x_nchw, (0, 2, 3, 1)).astype(jnp.float32)      # NHWC
    dn = ("NHWC", "HWIO", "NHWC")
    h = jax.nn.relu(bn(lax.conv_general_dilated(x, raw["w1"], (1, 1), "SAME",
                                                dimension_numbers=dn), raw["bn1"]))
    main = bn(lax.conv_general_dilated(h, raw["w2"], (1, 1), "SAME",
                                       dimension_numbers=dn), raw["bn2"])
    if raw["ws"] is not None:
        sc = bn(jnp.einsum("nhwc,co->nhwo", x, raw["ws"]), raw["bns"])
    else:
        sc = x
    return jnp.transpose(jax.nn.relu(main + sc), (0, 3, 1, 2))       # NCHW


# ---------------------------------------------------------------------------
if __name__ == "__main__":
    key = jax.random.PRNGKey(0)
    k_x, k_p1, k_p2 = jax.random.split(key, 3)

    N, S = 4, 16                                   # batch=4 -> 2 packed grid steps of 2

    # Projection-shortcut configuration (Cin != Cout).
    x = jax.random.normal(k_x, (N, 4, S, S), jnp.float32)            # NCHW, like PyTorch
    raw = make_raw_params(k_p1, 4, 8)
    params = prepare_params(raw)
    out = jax.block_until_ready(residual_block(x, params))
    ref = ref_residual_block(x, raw)
    assert out.shape == (N, 8, S, S)
    # bf16 MXU operands vs. the full-f32 reference -> modest tolerance
    assert jnp.allclose(out, ref, rtol=5e-2, atol=5e-2), (
        f"proj mismatch vs reference (max abs err {jnp.max(jnp.abs(out - ref)):.4f})")

    # Identity-shortcut configuration (Cin == Cout).
    x2 = jax.random.normal(k_x, (N, 8, S, S), jnp.float32)
    raw2 = make_raw_params(k_p2, 8, 8)
    params2 = prepare_params(raw2)
    out2 = jax.block_until_ready(residual_block(x2, params2))
    ref2 = ref_residual_block(x2, raw2)
    assert out2.shape == (N, 8, S, S)
    assert jnp.allclose(out2, ref2, rtol=5e-2, atol=5e-2), (
        f"identity mismatch vs reference (max abs err {jnp.max(jnp.abs(out2 - ref2)):.4f})")

    print("KERNEL_OK")
</pallas_src>

<mosaic_0001>
module attributes {stable_mosaic.version = 11 : i64} {
  func.func @_residual_kernel(%arg0: i32, %arg1: memref<2x4x256xf32, #tpu.memory_space<vmem>>, %arg2: memref<8x48xbf16, #tpu.memory_space<vmem>>, %arg3: memref<8x1xf32, #tpu.memory_space<vmem>>, %arg4: memref<8x80xbf16, #tpu.memory_space<vmem>>, %arg5: memref<8x1xf32, #tpu.memory_space<vmem>>, %arg6: memref<9x1x512xbf16, #tpu.memory_space<vmem>>, %arg7: memref<8x4xbf16, #tpu.memory_space<vmem>>, %arg8: memref<8x1xf32, #tpu.memory_space<vmem>>, %arg9: memref<2x8x256xf32, #tpu.memory_space<vmem>>, %arg10: memref<4x768xbf16, #tpu.memory_space<vmem>>, %arg11: memref<8x768xbf16, #tpu.memory_space<vmem>>, %arg12: memref<80x512xbf16, #tpu.memory_space<vmem>>) attributes {dimension_semantics = [#tpu.dimension_semantics<parallel>], iteration_bounds = array<i64: 2>, scalar_prefetch = 0 : i64, scratch_operands = 3 : i64, tpu.core_type = #tpu.core_type<tc>, window_params = [{transform_indices = @transform_0, window_bounds = array<i64: 2, 4, 256>}, {pipeline_mode = #tpu.pipeline_mode<synchronous>, transform_indices = @transform_1, window_bounds = array<i64: 8, 48>}, {pipeline_mode = #tpu.pipeline_mode<synchronous>, transform_indices = @transform_2, window_bounds = array<i64: 8, 1>}, {pipeline_mode = #tpu.pipeline_mode<synchronous>, transform_indices = @transform_3, window_bounds = array<i64: 8, 80>}, {pipeline_mode = #tpu.pipeline_mode<synchronous>, transform_indices = @transform_4, window_bounds = array<i64: 8, 1>}, {pipeline_mode = #tpu.pipeline_mode<synchronous>, transform_indices = @transform_5, window_bounds = array<i64: 9, 1, 512>}, {pipeline_mode = #tpu.pipeline_mode<synchronous>, transform_indices = @transform_6, window_bounds = array<i64: 8, 4>}, {pipeline_mode = #tpu.pipeline_mode<synchronous>, transform_indices = @transform_7, window_bounds = array<i64: 8, 1>}, {transform_indices = @transform_8, window_bounds = array<i64: 2, 8, 256>}]} {
    %cst = arith.constant 0.000000e+00 : bf16
    %0 = vector.broadcast %cst : bf16 to vector<4x128xbf16>
    %c0 = arith.constant 0 : index
    %c0_0 = arith.constant 0 : index
    %1 = vector.load %arg10[%c0, %c0_0] : memref<4x768xbf16, #tpu.memory_space<vmem>>, vector<4x128xbf16>
    tpu.vector_store %arg10[%c0, %c0_0], %0 {strides = array<i32>} : memref<4x768xbf16, #tpu.memory_space<vmem>>, vector<4x128xbf16>,
    %cst_1 = arith.constant 0.000000e+00 : bf16
    %2 = vector.broadcast %cst_1 : bf16 to vector<4x128xbf16>
    %c0_2 = arith.constant 0 : index
    %c640 = arith.constant 640 : index
    %3 = vector.load %arg10[%c0_2, %c640] : memref<4x768xbf16, #tpu.memory_space<vmem>>, vector<4x128xbf16>
    tpu.vector_store %arg10[%c0_2, %c640], %2 {strides = array<i32>} : memref<4x768xbf16, #tpu.memory_space<vmem>>, vector<4x128xbf16>,
    %cst_3 = arith.constant 0.000000e+00 : bf16
    %4 = vector.broadcast %cst_3 : bf16 to vector<8x128xbf16>
    %c0_4 = arith.constant 0 : index
    %c0_5 = arith.constant 0 : index
    %5 = vector.load %arg11[%c0_4, %c0_5] : memref<8x768xbf16, #tpu.memory_space<vmem>>, vector<8x128xbf16>
    tpu.vector_store %arg11[%c0_4, %c0_5], %4 {strides = array<i32>} : memref<8x768xbf16, #tpu.memory_space<vmem>>, vector<8x128xbf16>,
    %cst_6 = arith.constant 0.000000e+00 : bf16
    %6 = vector.broadcast %cst_6 : bf16 to vector<8x128xbf16>
    %c0_7 = arith.constant 0 : index
    %c640_8 = arith.constant 640 : index
    %7 = vector.load %arg11[%c0_7, %c640_8] : memref<8x768xbf16, #tpu.memory_space<vmem>>, vector<8x128xbf16>
    tpu.vector_store %arg11[%c0_7, %c640_8], %6 {strides = array<i32>} : memref<8x768xbf16, #tpu.memory_space<vmem>>, vector<8x128xbf16>,
    %cst_9 = arith.constant 0.000000e+00 : bf16
    %8 = vector.broadcast %cst_9 : bf16 to vector<12x512xbf16>
    %c36 = arith.constant 36 : index
    %c0_10 = arith.constant 0 : index
    %9 = vector.load %arg12[%c36, %c0_10] : memref<80x512xbf16, #tpu.memory_space<vmem>>, vector<12x512xbf16>
    tpu.vector_store %arg12[%c36, %c0_10], %8 {strides = array<i32>} : memref<80x512xbf16, #tpu.memory_space<vmem>>, vector<12x512xbf16>,
    %cst_11 = arith.constant 0.000000e+00 : bf16
    %10 = vector.broadcast %cst_11 : bf16 to vector<8x512xbf16>
    %c72 = arith.constant 72 : index
    %c0_12 = arith.constant 0 : index
    %11 = vector.load %arg12[%c72, %c0_12] : memref<80x512xbf16, #tpu.memory_space<vmem>>, vector<8x512xbf16>
    tpu.vector_store %arg12[%c72, %c0_12], %10 {strides = array<i32>} : memref<80x512xbf16, #tpu.memory_space<vmem>>, vector<8x512xbf16>,
    %c0_13 = arith.constant 0 : index
    %c0_14 = arith.constant 0 : index
    %c0_15 = arith.constant 0 : index
    %12 = vector.load %arg1[%c0_13, %c0_14, %c0_15] : memref<2x4x256xf32, #tpu.memory_space<vmem>>, vector<1x4x256xf32>
    %13 = vector.shape_cast %12 : vector<1x4x256xf32> to vector<4x256xf32>
    %14 = arith.truncf %13 : vector<4x256xf32> to vector<4x256xbf16>
    %c0_16 = arith.constant 0 : index
    %c128 = arith.constant 128 : index
    %15 = vector.load %arg10[%c0_16, %c128] : memref<4x768xbf16, #tpu.memory_space<vmem>>, vector<4x256xbf16>
    tpu.vector_store %arg10[%c0_16, %c128], %14 {strides = array<i32>} : memref<4x768xbf16, #tpu.memory_space<vmem>>, vector<4x256xbf16>,
    %c1 = arith.constant 1 : index
    %c0_17 = arith.constant 0 : index
    %c0_18 = arith.constant 0 : index
    %16 = vector.load %arg1[%c1, %c0_17, %c0_18] : memref<2x4x256xf32, #tpu.memory_space<vmem>>, vector<1x4x256xf32>
    %17 = vector.shape_cast %16 : vector<1x4x256xf32> to vector<4x256xf32>
    %18 = arith.truncf %17 : vector<4x256xf32> to vector<4x256xbf16>
    %c0_19 = arith.constant 0 : index
    %c384 = arith.constant 384 : index
    %19 = vector.load %arg10[%c0_19, %c384] : memref<4x768xbf16, #tpu.memory_space<vmem>>, vector<4x256xbf16>
    tpu.vector_store %arg10[%c0_19, %c384], %18 {strides = array<i32>} : memref<4x768xbf16, #tpu.memory_space<vmem>>, vector<4x256xbf16>,
    %c0_20 = arith.constant 0 : index
    %c0_21 = arith.constant 0 : index
    %c0_22 = arith.constant 0 : index
    %20 = vector.load %arg6[%c0_20, %c0_21, %c0_22] : memref<9x1x512xbf16, #tpu.memory_space<vmem>>, vector<1x1x512xbf16>
    %21 = vector.shape_cast %20 : vector<1x1x512xbf16> to vector<1x512xbf16>
    %c1_23 = arith.constant 1 : index
    %c0_24 = arith.constant 0 : index
    %c0_25 = arith.constant 0 : index
    %22 = vector.load %arg6[%c1_23, %c0_24, %c0_25] : memref<9x1x512xbf16, #tpu.memory_space<vmem>>, vector<1x1x512xbf16>
    %23 = vector.shape_cast %22 : vector<1x1x512xbf16> to vector<1x512xbf16>
    %c2 = arith.constant 2 : index
    %c0_26 = arith.constant 0 : index
    %c0_27 = arith.constant 0 : index
    %24 = vector.load %arg6[%c2, %c0_26, %c0_27] : memref<9x1x512xbf16, #tpu.memory_space<vmem>>, vector<1x1x512xbf16>
    %25 = vector.shape_cast %24 : vector<1x1x512xbf16> to vector<1x512xbf16>
    %c3 = arith.constant 3 : index
    %c0_28 = arith.constant 0 : index
    %c0_29 = arith.constant 0 : index
    %26 = vector.load %arg6[%c3, %c0_28, %c0_29] : memref<9x1x512xbf16, #tpu.memory_space<vmem>>, vector<1x1x512xbf16>
    %27 = vector.shape_cast %26 : vector<1x1x512xbf16> to vector<1x512xbf16>
    %c5 = arith.constant 5 : index
    %c0_30 = arith.constant 0 : index
    %c0_31 = arith.constant 0 : index
    %28 = vector.load %arg6[%c5, %c0_30, %c0_31] : memref<9x1x512xbf16, #tpu.memory_space<vmem>>, vector<1x1x512xbf16>
    %29 = vector.shape_cast %28 : vector<1x1x512xbf16> to vector<1x512xbf16>
    %c6 = arith.constant 6 : index
    %c0_32 = arith.constant 0 : index
    %c0_33 = arith.constant 0 : index
    %30 = vector.load %arg6[%c6, %c0_32, %c0_33] : memref<9x1x512xbf16, #tpu.memory_space<vmem>>, vector<1x1x512xbf16>
    %31 = vector.shape_cast %30 : vector<1x1x512xbf16> to vector<1x512xbf16>
    %c7 = arith.constant 7 : index
    %c0_34 = arith.constant 0 : index
    %c0_35 = arith.constant 0 : index
    %32 = vector.load %arg6[%c7, %c0_34, %c0_35] : memref<9x1x512xbf16, #tpu.memory_space<vmem>>, vector<1x1x512xbf16>
    %33 = vector.shape_cast %32 : vector<1x1x512xbf16> to vector<1x512xbf16>
    %c8 = arith.constant 8 : index
    %c0_36 = arith.constant 0 : index
    %c0_37 = arith.constant 0 : index
    %34 = vector.load %arg6[%c8, %c0_36, %c0_37] : memref<9x1x512xbf16, #tpu.memory_space<vmem>>, vector<1x1x512xbf16>
    %35 = vector.shape_cast %34 : vector<1x1x512xbf16> to vector<1x512xbf16>
    %c0_38 = arith.constant 0 : index
    %c111 = arith.constant 111 : index
    %36 = vector.load %arg10[%c0_38, %c111] : memref<4x768xbf16, #tpu.memory_space<vmem>>, vector<4x512xbf16>
    %37 = vector.broadcast %21 : vector<1x512xbf16> to vector<4x512xbf16>
    %38 = arith.mulf %36, %37 : vector<4x512xbf16>
    %c0_39 = arith.constant 0 : index
    %c0_40 = arith.constant 0 : index
    %39 = vector.load %arg12[%c0_39, %c0_40] : memref<80x512xbf16, #tpu.memory_space<vmem>>, vector<4x512xbf16>
    tpu.vector_store %arg12[%c0_39, %c0_40], %38 {strides = array<i32>} : memref<80x512xbf16, #tpu.memory_space<vmem>>, vector<4x512xbf16>,
    %c0_41 = arith.constant 0 : index
    %c112 = arith.constant 112 : index
    %40 = vector.load %arg10[%c0_41, %c112] : memref<4x768xbf16, #tpu.memory_space<vmem>>, vector<4x512xbf16>
    %41 = vector.broadcast %23 : vector<1x512xbf16> to vector<4x512xbf16>
    %42 = arith.mulf %40, %41 : vector<4x512xbf16>
    %c4 = arith.constant 4 : index
    %c0_42 = arith.constant 0 : index
    %43 = vector.load %arg12[%c4, %c0_42] : memref<80x512xbf16, #tpu.memory_space<vmem>>, vector<4x512xbf16>
    tpu.vector_store %arg12[%c4, %c0_42], %42 {strides = array<i32>} : memref<80x512xbf16, #tpu.memory_space<vmem>>, vector<4x512xbf16>,
    %c0_43 = arith.constant 0 : index
    %c113 = arith.constant 113 : index
    %44 = vector.load %arg10[%c0_43, %c113] : memref<4x768xbf16, #tpu.memory_space<vmem>>, vector<4x512xbf16>
    %45 = vector.broadcast %25 : vector<1x512xbf16> to vector<4x512xbf16>
    %46 = arith.mulf %44, %45 : vector<4x512xbf16>
    %c8_44 = arith.constant 8 : index
    %c0_45 = arith.constant 0 : index
    %47 = vector.load %arg12[%c8_44, %c0_45] : memref<80x512xbf16, #tpu.memory_space<vmem>>, vector<4x512xbf16>
    tpu.vector_store %arg12[%c8_44, %c0_45], %46 {strides = array<i32>} : memref<80x512xbf16, #tpu.memory_space<vmem>>, vector<4x512xbf16>,
    %c0_46 = arith.constant 0 : index
    %c127 = arith.constant 127 : index
    %48 = vector.load %arg10[%c0_46, %c127] : memref<4x768xbf16, #tpu.memory_space<vmem>>, vector<4x512xbf16>
    %49 = vector.broadcast %27 : vector<1x512xbf16> to vector<4x512xbf16>
    %50 = arith.mulf %48, %49 : vector<4x512xbf16>
    %c12 = arith.constant 12 : index
    %c0_47 = arith.constant 0 : index
    %51 = vector.load %arg12[%c12, %c0_47] : memref<80x512xbf16, #tpu.memory_space<vmem>>, vector<4x512xbf16>
    tpu.vector_store %arg12[%c12, %c0_47], %50 {strides = array<i32>} : memref<80x512xbf16, #tpu.memory_space<vmem>>, vector<4x512xbf16>,
    %c0_48 = arith.constant 0 : index
    %c128_49 = arith.constant 128 : index
    %52 = vector.load %arg10[%c0_48, %c128_49] : memref<4x768xbf16, #tpu.memory_space<vmem>>, vector<4x512xbf16>
    %c16 = arith.constant 16 : index
    %c0_50 = arith.constant 0 : index
    %53 = vector.load %arg12[%c16, %c0_50] : memref<80x512xbf16, #tpu.memory_space<vmem>>, vector<4x512xbf16>
    tpu.vector_store %arg12[%c16, %c0_50], %52 {strides = array<i32>} : memref<80x512xbf16, #tpu.memory_space<vmem>>, vector<4x512xbf16>,
    %c0_51 = arith.constant 0 : index
    %c129 = arith.constant 129 : index
    %54 = vector.load %arg10[%c0_51, %c129] : memref<4x768xbf16, #tpu.memory_space<vmem>>, vector<4x512xbf16>
    %55 = vector.broadcast %29 : vector<1x512xbf16> to vector<4x512xbf16>
    %56 = arith.mulf %54, %55 : vector<4x512xbf16>
    %c20 = arith.constant 20 : index
    %c0_52 = arith.constant 0 : index
    %57 = vector.load %arg12[%c20, %c0_52] : memref<80x512xbf16, #tpu.memory_space<vmem>>, vector<4x512xbf16>
    tpu.vector_store %arg12[%c20, %c0_52], %56 {strides = array<i32>} : memref<80x512xbf16, #tpu.memory_space<vmem>>, vector<4x512xbf16>,
    %c0_53 = arith.constant 0 : index
    %c143 = arith.constant 143 : index
    %58 = vector.load %arg10[%c0_53, %c143] : memref<4x768xbf16, #tpu.memory_space<vmem>>, vector<4x512xbf16>
    %59 = vector.broadcast %31 : vector<1x512xbf16> to vector<4x512xbf16>
    %60 = arith.mulf %58, %59 : vector<4x512xbf16>
    %c24 = arith.constant 24 : index
    %c0_54 = arith.constant 0 : index
    %61 = vector.load %arg12[%c24, %c0_54] : memref<80x512xbf16, #tpu.memory_space<vmem>>, vector<4x512xbf16>
    tpu.vector_store %arg12[%c24, %c0_54], %60 {strides = array<i32>} : memref<80x512xbf16, #tpu.memory_space<vmem>>, vector<4x512xbf16>,
    %c0_55 = arith.constant 0 : index
    %c144 = arith.constant 144 : index
    %62 = vector.load %arg10[%c0_55, %c144] : memref<4x768xbf16, #tpu.memory_space<vmem>>, vector<4x512xbf16>
    %63 = vector.broadcast %33 : vector<1x512xbf16> to vector<4x512xbf16>
    %64 = arith.mulf %62, %63 : vector<4x512xbf16>
    %c28 = arith.constant 28 : index
    %c0_56 = arith.constant 0 : index
    %65 = vector.load %arg12[%c28, %c0_56] : memref<80x512xbf16, #tpu.memory_space<vmem>>, vector<4x512xbf16>
    tpu.vector_store %arg12[%c28, %c0_56], %64 {strides = array<i32>} : memref<80x512xbf16, #tpu.memory_space<vmem>>, vector<4x512xbf16>,
    %c0_57 = arith.constant 0 : index
    %c145 = arith.constant 145 : index
    %66 = vector.load %arg10[%c0_57, %c145] : memref<4x768xbf16, #tpu.memory_space<vmem>>, vector<4x512xbf16>
    %67 = vector.broadcast %35 : vector<1x512xbf16> to vector<4x512xbf16>
    %68 = arith.mulf %66, %67 : vector<4x512xbf16>
    %c32 = arith.constant 32 : index
    %c0_58 = arith.constant 0 : index
    %69 = vector.load %arg12[%c32, %c0_58] : memref<80x512xbf16, #tpu.memory_space<vmem>>, vector<4x512xbf16>
    tpu.vector_store %arg12[%c32, %c0_58], %68 {strides = array<i32>} : memref<80x512xbf16, #tpu.memory_space<vmem>>, vector<4x512xbf16>,
    %c0_59 = arith.constant 0 : index
    %c0_60 = arith.constant 0 : index
    %70 = vector.load %arg2[%c0_59, %c0_60] : memref<8x48xbf16, #tpu.memory_space<vmem>>, vector<8x48xbf16>
    %c0_61 = arith.constant 0 : index
    %c0_62 = arith.constant 0 : index
    %71 = vector.load %arg12[%c0_61, %c0_62] : memref<80x512xbf16, #tpu.memory_space<vmem>>, vector<48x512xbf16>
    %cst_63 = arith.constant dense<0.000000e+00> : vector<8x512xf32>
    %72 = tpu.matmul %70, %71, %cst_63 {dimension_numbers = #tpu.dot_dimension_numbers<[1], [0], [0], [1], [0, 0, 1, 1], [], []>} : vector<8x48xbf16>, vector<48x512xbf16>, vector<8x512xf32> -> vector<8x512xf32>
    %c0_64 = arith.constant 0 : index
    %c0_65 = arith.constant 0 : index
    %73 = vector.load %arg3[%c0_64, %c0_65] : memref<8x1xf32, #tpu.memory_space<vmem>>, vector<8x1xf32>
    %74 = vector.broadcast %73 : vector<8x1xf32> to vector<8x512xf32>
    %75 = arith.addf %72, %74 : vector<8x512xf32>
    %cst_66 = arith.constant 0.000000e+00 : f32
    %76 = vector.broadcast %cst_66 : f32 to vector<8x512xf32>
    %77 = arith.maximumf %75, %76 : vector<8x512xf32>
    %78 = arith.truncf %77 : vector<8x512xf32> to vector<8x512xbf16>
    %c0_67 = arith.constant 0 : index
    %c128_68 = arith.constant 128 : index
    %79 = vector.load %arg11[%c0_67, %c128_68] : memref<8x768xbf16, #tpu.memory_space<vmem>>, vector<8x512xbf16>
    tpu.vector_store %arg11[%c0_67, %c128_68], %78 {strides = array<i32>} : memref<8x768xbf16, #tpu.memory_space<vmem>>, vector<8x512xbf16>,
    %c0_69 = arith.constant 0 : index
    %c111_70 = arith.constant 111 : index
    %80 = vector.load %arg11[%c0_69, %c111_70] : memref<8x768xbf16, #tpu.memory_space<vmem>>, vector<8x512xbf16>
    %81 = vector.broadcast %21 : vector<1x512xbf16> to vector<8x512xbf16>
    %82 = arith.mulf %80, %81 : vector<8x512xbf16>
    %c0_71 = arith.constant 0 : index
    %c0_72 = arith.constant 0 : index
    %83 = vector.load %arg12[%c0_71, %c0_72] : memref<80x512xbf16, #tpu.memory_space<vmem>>, vector<8x512xbf16>
    tpu.vector_store %arg12[%c0_71, %c0_72], %82 {strides = array<i32>} : memref<80x512xbf16, #tpu.memory_space<vmem>>, vector<8x512xbf16>,
    %c0_73 = arith.constant 0 : index
    %c112_74 = arith.constant 112 : index
    %84 = vector.load %arg11[%c0_73, %c112_74] : memref<8x768xbf16, #tpu.memory_space<vmem>>, vector<8x512xbf16>
    %85 = vector.broadcast %23 : vector<1x512xbf16> to vector<8x512xbf16>
    %86 = arith.mulf %84, %85 : vector<8x512xbf16>
    %c8_75 = arith.constant 8 : index
    %c0_76 = arith.constant 0 : index
    %87 = vector.load %arg12[%c8_75, %c0_76] : memref<80x512xbf16, #tpu.memory_space<vmem>>, vector<8x512xbf16>
    tpu.vector_store %arg12[%c8_75, %c0_76], %86 {strides = array<i32>} : memref<80x512xbf16, #tpu.memory_space<vmem>>, vector<8x512xbf16>,
    %c0_77 = arith.constant 0 : index
    %c113_78 = arith.constant 113 : index
    %88 = vector.load %arg11[%c0_77, %c113_78] : memref<8x768xbf16, #tpu.memory_space<vmem>>, vector<8x512xbf16>
    %89 = vector.broadcast %25 : vector<1x512xbf16> to vector<8x512xbf16>
    %90 = arith.mulf %88, %89 : vector<8x512xbf16>
    %c16_79 = arith.constant 16 : index
    %c0_80 = arith.constant 0 : index
    %91 = vector.load %arg12[%c16_79, %c0_80] : memref<80x512xbf16, #tpu.memory_space<vmem>>, vector<8x512xbf16>
    tpu.vector_store %arg12[%c16_79, %c0_80], %90 {strides = array<i32>} : memref<80x512xbf16, #tpu.memory_space<vmem>>, vector<8x512xbf16>,
    %c0_81 = arith.constant 0 : index
    %c127_82 = arith.constant 127 : index
    %92 = vector.load %arg11[%c0_81, %c127_82] : memref<8x768xbf16, #tpu.memory_space<vmem>>, vector<8x512xbf16>
    %93 = vector.broadcast %27 : vector<1x512xbf16> to vector<8x512xbf16>
    %94 = arith.mulf %92, %93 : vector<8x512xbf16>
    %c24_83 = arith.constant 24 : index
    %c0_84 = arith.constant 0 : index
    %95 = vector.load %arg12[%c24_83, %c0_84] : memref<80x512xbf16, #tpu.memory_space<vmem>>, vector<8x512xbf16>
    tpu.vector_store %arg12[%c24_83, %c0_84], %94 {strides = array<i32>} : memref<80x512xbf16, #tpu.memory_space<vmem>>, vector<8x512xbf16>,
    %c0_85 = arith.constant 0 : index
    %c128_86 = arith.constant 128 : index
    %96 = vector.load %arg11[%c0_85, %c128_86] : memref<8x768xbf16, #tpu.memory_space<vmem>>, vector<8x512xbf16>
    %c32_87 = arith.constant 32 : index
    %c0_88 = arith.constant 0 : index
    %97 = vector.load %arg12[%c32_87, %c0_88] : memref<80x512xbf16, #tpu.memory_space<vmem>>, vector<8x512xbf16>
    tpu.vector_store %arg12[%c32_87, %c0_88], %96 {strides = array<i32>} : memref<80x512xbf16, #tpu.memory_space<vmem>>, vector<8x512xbf16>,
    %c0_89 = arith.constant 0 : index
    %c129_90 = arith.constant 129 : index
    %98 = vector.load %arg11[%c0_89, %c129_90] : memref<8x768xbf16, #tpu.memory_space<vmem>>, vector<8x512xbf16>
    %99 = vector.broadcast %29 : vector<1x512xbf16> to vector<8x512xbf16>
    %100 = arith.mulf %98, %99 : vector<8x512xbf16>
    %c40 = arith.constant 40 : index
    %c0_91 = arith.constant 0 : index
    %101 = vector.load %arg12[%c40, %c0_91] : memref<80x512xbf16, #tpu.memory_space<vmem>>, vector<8x512xbf16>
    tpu.vector_store %arg12[%c40, %c0_91], %100 {strides = array<i32>} : memref<80x512xbf16, #tpu.memory_space<vmem>>, vector<8x512xbf16>,
    %c0_92 = arith.constant 0 : index
    %c143_93 = arith.constant 143 : index
    %102 = vector.load %arg11[%c0_92, %c143_93] : memref<8x768xbf16, #tpu.memory_space<vmem>>, vector<8x512xbf16>
    %103 = vector.broadcast %31 : vector<1x512xbf16> to vector<8x512xbf16>
    %104 = arith.mulf %102, %103 : vector<8x512xbf16>
    %c48 = arith.constant 48 : index
    %c0_94 = arith.constant 0 : index
    %105 = vector.load %arg12[%c48, %c0_94] : memref<80x512xbf16, #tpu.memory_space<vmem>>, vector<8x512xbf16>
    tpu.vector_store %arg12[%c48, %c0_94], %104 {strides = array<i32>} : memref<80x512xbf16, #tpu.memory_space<vmem>>, vector<8x512xbf16>,
    %c0_95 = arith.constant 0 : index
    %c144_96 = arith.constant 144 : index
    %106 = vector.load %arg11[%c0_95, %c144_96] : memref<8x768xbf16, #tpu.memory_space<vmem>>, vector<8x512xbf16>
    %107 = vector.broadcast %33 : vector<1x512xbf16> to vector<8x512xbf16>
    %108 = arith.mulf %106, %107 : vector<8x512xbf16>
    %c56 = arith.constant 56 : index
    %c0_97 = arith.constant 0 : index
    %109 = vector.load %arg12[%c56, %c0_97] : memref<80x512xbf16, #tpu.memory_space<vmem>>, vector<8x512xbf16>
    tpu.vector_store %arg12[%c56, %c0_97], %108 {strides = array<i32>} : memref<80x512xbf16, #tpu.memory_space<vmem>>, vector<8x512xbf16>,
    %c0_98 = arith.constant 0 : index
    %c145_99 = arith.constant 145 : index
    %110 = vector.load %arg11[%c0_98, %c145_99] : memref<8x768xbf16, #tpu.memory_space<vmem>>, vector<8x512xbf16>
    %111 = vector.broadcast %35 : vector<1x512xbf16> to vector<8x512xbf16>
    %112 = arith.mulf %110, %111 : vector<8x512xbf16>
    %c64 = arith.constant 64 : index
    %c0_100 = arith.constant 0 : index
    %113 = vector.load %arg12[%c64, %c0_100] : memref<80x512xbf16, #tpu.memory_space<vmem>>, vector<8x512xbf16>
    tpu.vector_store %arg12[%c64, %c0_100], %112 {strides = array<i32>} : memref<80x512xbf16, #tpu.memory_space<vmem>>, vector<8x512xbf16>,
    %c0_101 = arith.constant 0 : index
    %c0_102 = arith.constant 0 : index
    %114 = vector.load %arg4[%c0_101, %c0_102] : memref<8x80xbf16, #tpu.memory_space<vmem>>, vector<8x80xbf16>
    %c0_103 = arith.constant 0 : index
    %c0_104 = arith.constant 0 : index
    %115 = vector.load %arg12[%c0_103, %c0_104] : memref<80x512xbf16, #tpu.memory_space<vmem>>, vector<80x512xbf16>
    %cst_105 = arith.constant dense<0.000000e+00> : vector<8x512xf32>
    %116 = tpu.matmul %114, %115, %cst_105 {dimension_numbers = #tpu.dot_dimension_numbers<[1], [0], [0], [1], [0, 0, 1, 1], [], []>} : vector<8x80xbf16>, vector<80x512xbf16>, vector<8x512xf32> -> vector<8x512xf32>
    %c0_106 = arith.constant 0 : index
    %c0_107 = arith.constant 0 : index
    %117 = vector.load %arg5[%c0_106, %c0_107] : memref<8x1xf32, #tpu.memory_space<vmem>>, vector<8x1xf32>
    %118 = vector.broadcast %117 : vector<8x1xf32> to vector<8x512xf32>
    %119 = arith.addf %116, %118 : vector<8x512xf32>
    %c0_108 = arith.constant 0 : index
    %c128_109 = arith.constant 128 : index
    %120 = vector.load %arg10[%c0_108, %c128_109] : memref<4x768xbf16, #tpu.memory_space<vmem>>, vector<4x512xbf16>
    %c0_110 = arith.constant 0 : index
    %c0_111 = arith.constant 0 : index
    %121 = vector.load %arg7[%c0_110, %c0_111] : memref<8x4xbf16, #tpu.memory_space<vmem>>, vector<8x4xbf16>
    %cst_112 = arith.constant dense<0.000000e+00> : vector<8x512xf32>
    %122 = tpu.matmul %121, %120, %cst_112 {dimension_numbers = #tpu.dot_dimension_numbers<[1], [0], [0], [1], [0, 0, 1, 1], [], []>} : vector<8x4xbf16>, vector<4x512xbf16>, vector<8x512xf32> -> vector<8x512xf32>
    %123 = arith.addf %119, %122 : vector<8x512xf32>
    %c0_113 = arith.constant 0 : index
    %c0_114 = arith.constant 0 : index
    %124 = vector.load %arg8[%c0_113, %c0_114] : memref<8x1xf32, #tpu.memory_space<vmem>>, vector<8x1xf32>
    %125 = vector.broadcast %124 : vector<8x1xf32> to vector<8x512xf32>
    %126 = arith.addf %123, %125 : vector<8x512xf32>
    %127 = vector.extract_strided_slice %126 {offsets = [0, 0], sizes = [8, 256], strides = [1, 1]} : vector<8x512xf32> to vector<8x256xf32>
    %cst_115 = arith.constant 0.000000e+00 : f32
    %128 = vector.broadcast %cst_115 : f32 to vector<8x256xf32>
    %129 = arith.maximumf %127, %128 : vector<8x256xf32>
    %c0_116 = arith.constant 0 : index
    %c0_117 = arith.constant 0 : index
    %c0_118 = arith.constant 0 : index
    %130 = vector.load %arg9[%c0_116, %c0_117, %c0_118] : memref<2x8x256xf32, #tpu.memory_space<vmem>>, vector<1x8x256xf32>
    %131 = vector.shape_cast %130 : vector<1x8x256xf32> to vector<8x256xf32>
    %132 = vector.shape_cast %129 : vector<8x256xf32> to vector<1x8x256xf32>
    tpu.vector_store %arg9[%c0_116, %c0_117, %c0_118], %132 {strides = array<i32>} : memref<2x8x256xf32, #tpu.memory_space<vmem>>, vector<1x8x256xf32>,
    %133 = vector.extract_strided_slice %126 {offsets = [0, 256], sizes = [8, 256], strides = [1, 1]} : vector<8x512xf32> to vector<8x256xf32>
    %cst_119 = arith.constant 0.000000e+00 : f32
    %134 = vector.broadcast %cst_119 : f32 to vector<8x256xf32>
    %135 = arith.maximumf %133, %134 : vector<8x256xf32>
    %c1_120 = arith.constant 1 : index
    %c0_121 = arith.constant 0 : index
    %c0_122 = arith.constant 0 : index
    %136 = vector.load %arg9[%c1_120, %c0_121, %c0_122] : memref<2x8x256xf32, #tpu.memory_space<vmem>>, vector<1x8x256xf32>
    %137 = vector.shape_cast %136 : vector<1x8x256xf32> to vector<8x256xf32>
    %138 = vector.shape_cast %135 : vector<8x256xf32> to vector<1x8x256xf32>
    tpu.vector_store %arg9[%c1_120, %c0_121, %c0_122], %138 {strides = array<i32>} : memref<2x8x256xf32, #tpu.memory_space<vmem>>, vector<1x8x256xf32>,
    return
  }
  func.func @transform_0(%arg0: i32) -> (i32, i32, i32) {
    %c0_i32 = arith.constant 0 : i32
    %c0_i32_0 = arith.constant 0 : i32
    %c0_i32_1 = arith.constant 0 : i32
    return %arg0, %c0_i32, %c0_i32_0 : i32, i32, i32
  }
  func.func @transform_1(%arg0: i32) -> (i32, i32) {
    %c0_i32 = arith.constant 0 : i32
    %c0_i32_0 = arith.constant 0 : i32
    %c0_i32_1 = arith.constant 0 : i32
    return %c0_i32, %c0_i32_0 : i32, i32
  }
  func.func @transform_2(%arg0: i32) -> (i32, i32) {
    %c0_i32 = arith.constant 0 : i32
    %c0_i32_0 = arith.constant 0 : i32
    %c0_i32_1 = arith.constant 0 : i32
    return %c0_i32, %c0_i32_0 : i32, i32
  }
  func.func @transform_3(%arg0: i32) -> (i32, i32) {
    %c0_i32 = arith.constant 0 : i32
    %c0_i32_0 = arith.constant 0 : i32
    %c0_i32_1 = arith.constant 0 : i32
    return %c0_i32, %c0_i32_0 : i32, i32
  }
  func.func @transform_4(%arg0: i32) -> (i32, i32) {
    %c0_i32 = arith.constant 0 : i32
    %c0_i32_0 = arith.constant 0 : i32
    %c0_i32_1 = arith.constant 0 : i32
    return %c0_i32, %c0_i32_0 : i32, i32
  }
  func.func @transform_5(%arg0: i32) -> (i32, i32, i32) {
    %c0_i32 = arith.constant 0 : i32
    %c0_i32_0 = arith.constant 0 : i32
    %c0_i32_1 = arith.constant 0 : i32
    %c0_i32_2 = arith.constant 0 : i32
    return %c0_i32, %c0_i32_0, %c0_i32_1 : i32, i32, i32
  }
  func.func @transform_6(%arg0: i32) -> (i32, i32) {
    %c0_i32 = arith.constant 0 : i32
    %c0_i32_0 = arith.constant 0 : i32
    %c0_i32_1 = arith.constant 0 : i32
    return %c0_i32, %c0_i32_0 : i32, i32
  }
  func.func @transform_7(%arg0: i32) -> (i32, i32) {
    %c0_i32 = arith.constant 0 : i32
    %c0_i32_0 = arith.constant 0 : i32
    %c0_i32_1 = arith.constant 0 : i32
    return %c0_i32, %c0_i32_0 : i32, i32
  }
  func.func @transform_8(%arg0: i32) -> (i32, i32, i32) {
    %c0_i32 = arith.constant 0 : i32
    %c0_i32_0 = arith.constant 0 : i32
    %c0_i32_1 = arith.constant 0 : i32
    return %arg0, %c0_i32, %c0_i32_0 : i32, i32, i32
  }
}

</mosaic_0001>

<llo_original>
// kernel: tpu_custom_call.1
$region0: #{tpu_custom_call.1}
  #allocation0 [shape = 'u32[]', space=smem, size = 0x4, offset = 0x4, fixed_abs, tag = 'smem constant byte address 0x4 - core index']
  #allocation1 [shape = 'u32[72,128]{1,0:T(1,128)}', space=vmem, size = 0x9000, scoped, tag = 'internal scratch']
  #allocation2 [shape = 'bf16[4,768]{1,0:T(4,128)(2,1)}', space=vmem, size = 0x1800, scoped, tag = 'scratch operand']
  #allocation3 [shape = 'bf16[8,768]{1,0:T(8,128)(2,1)}', space=vmem, size = 0x3000, scoped, tag = 'scratch operand']
  #allocation4 [shape = 'bf16[80,512]{1,0:T(8,128)(2,1)}', space=vmem, size = 0x14000, scoped, tag = 'scratch operand']
  %s0 = inlined_call_operand.vmem [shape: f32[4,4,256], index: 0, kind: input, shape index: {}]
  %s1 = inlined_call_operand.vmem [shape: bf16[8,48], index: 1, kind: input, shape index: {}]
  %s2 = inlined_call_operand.vmem [shape: f32[8,1], index: 2, kind: input, shape index: {}]
  %s3 = inlined_call_operand.vmem [shape: bf16[8,80], index: 3, kind: input, shape index: {}]
  %s4 = inlined_call_operand.vmem [shape: f32[8,1], index: 4, kind: input, shape index: {}]
  %s5 = inlined_call_operand.vmem [shape: bf16[9,1,512], index: 5, kind: input, shape index: {}]
  %s6 = inlined_call_operand.vmem [shape: bf16[8,4], index: 6, kind: input, shape index: {}]
  %s7 = inlined_call_operand.vmem [shape: f32[8,1], index: 7, kind: input, shape index: {}]
  %s8 = inlined_call_operand.hbm [shape: f32[4,8,256], index: 8, kind: output, shape index: {}]
  %s9 = sld [smem:[#allocation0]]
  $region65: #{tpu_custom_call.1} parent=0
    _
  %s11 = ssub.s32 1, %s9
  %s12 = scalar_select 0, %s11, %s9
  $region1: #{tpu_custom_call.1} parent=0
    #allocation5 [shape = 'u8[32768]{0}', space=vmem, size = 0x8000, scoped, tag = 'output window, operand 0']
    #allocation6 [shape = 's32[2]{0}', space=sflag, size = 0x8, scoped, tag = 'scoped memory for tpu_custom_call.1']
    %13 = vsyncpa [#allocation6], 0
    %s14 = scalar_lea.sflag [#allocation6], 1
    %15 = vsyncpa %s14, 0
    loop: start=0, step=1, limit=4
    $region2: #{tpu_custom_call.1} parent=1 // loop_pre_header
      _
    $region3: #{tpu_custom_call.1} parent=1 // loop_header
      %s17 = sphi 0, %s21
      %p18 = scmp.ge.s32.totalorder %s17, 4
      %s27 = sphi 0, %s29
      %s30 = sphi 0, %s27
      %s31 = sphi 0, %s30
      %s47 = sphi 0, %s31
      %s51 = sphi 0, %s51
      %s53 = sphi 0, %s51
      %s54 = sphi 0, %s53
      %s68 = sphi 0, %s54
      %s72 = sphi 0, %s72
      %s74 = sphi 0, %s72
      %s75 = sphi 0, %s74
      %s89 = sphi 0, %s75
      %s93 = sphi 0, %s93
      %s95 = sphi 0, %s93
      %s96 = sphi 0, %s95
      %s110 = sphi 0, %s96
      %s114 = sphi 0, %s114
      %s116 = sphi 0, %s114
      %s117 = sphi 0, %s116
      %s131 = sphi 0, %s117
      %s135 = sphi 0, %s135
      %s137 = sphi 0, %s135
      %s138 = sphi 0, %s137
      %s152 = sphi 0, %s138
      %s156 = sphi 0, %s156
      %s158 = sphi 0, %s156
      %s159 = sphi 0, %s158
      %s173 = sphi 0, %s159
      %s177 = sphi 0, %s177
      %s179 = sphi 0, %s177
      %s180 = sphi 0, %s179
      %s194 = sphi 0, %s180
      %s200 = sphi 0, %s202
      %s203 = sphi 0, %s200
      %s204 = sphi 0, %s203
      %s220 = sphi 0, %s204
    $region4: #{tpu_custom_call.1} parent=1 // loop_header_branch
      %20 = sbr.rel (%p18) target = $region8
    $region5: #{tpu_custom_call.1} parent=1 // loop_body
      %s22 = ssub.s32 %s17, 1
      %s23 = ssub.s32 %s17, 2
      %s24 = sadd.s32 %s17, 1
      %s25 = ssub.s32 %s17, %s24
      %p26 = scmp.eq.s32.totalorder %s25, 0
      %s28 = sadd.s32 %s27, 1
      %s29 = scalar_select %p26, %s27, %s28
      %p32 = pneg %p26
      %p33 = scmp.eq.s32.totalorder %s17, 1
      %p34 = por %p32, %p33
      %p35 = scmp.ne.s32.totalorder %s27, %s30
      %p36 = scmp.eq.s32.totalorder %s17, 0
      %p37 = por %p35, %p36
      %p38 = scmp.ne.s32.totalorder %s27, %s30
      %p39 = scmp.eq.s32.totalorder %s22, 1
      %p40 = por %p38, %p39
      %p41 = scmp.ne.s32.totalorder %s30, %s31
      %p42 = scmp.eq.s32.totalorder %s22, 0
      %p43 = por %p41, %p42
      %p44 = scmp.ne.s32.totalorder %s30, %s31
      %p45 = scmp.eq.s32.totalorder %s23, 1
      %p46 = por %p44, %p45
      %p48 = scmp.ne.s32.totalorder %s31, %s47
      %p49 = scmp.eq.s32.totalorder %s23, 0
      %p50 = por %p48, %p49
      %s52 = sadd.s32 %s51, 1
      %p55 = scmp.eq.s32.totalorder %s17, 1
      %p56 = scmp.ne.s32.totalorder %s51, %s53
      %p57 = scmp.eq.s32.totalorder %s17, 0
      %p58 = por %p56, %p57
      %p59 = scmp.ne.s32.totalorder %s51, %s53
      %p60 = scmp.eq.s32.totalorder %s22, 1
      %p61 = por %p59, %p60
      %p62 = scmp.ne.s32.totalorder %s53, %s54
      %p63 = scmp.eq.s32.totalorder %s22, 0
      %p64 = por %p62, %p63
      %p65 = scmp.ne.s32.totalorder %s53, %s54
      %p66 = scmp.eq.s32.totalorder %s23, 1
      %p67 = por %p65, %p66
      %p69 = scmp.ne.s32.totalorder %s54, %s68
      %p70 = scmp.eq.s32.totalorder %s23, 0
      %p71 = por %p69, %p70
      %s73 = sadd.s32 %s72, 1
      %p76 = scmp.eq.s32.totalorder %s17, 1
      %p77 = scmp.ne.s32.totalorder %s72, %s74
      %p78 = scmp.eq.s32.totalorder %s17, 0
      %p79 = por %p77, %p78
      %p80 = scmp.ne.s32.totalorder %s72, %s74
      %p81 = scmp.eq.s32.totalorder %s22, 1
      %p82 = por %p80, %p81
      %p83 = scmp.ne.s32.totalorder %s74, %s75
      %p84 = scmp.eq.s32.totalorder %s22, 0
      %p85 = por %p83, %p84
      %p86 = scmp.ne.s32.totalorder %s74, %s75
      %p87 = scmp.eq.s32.totalorder %s23, 1
      %p88 = por %p86, %p87
      %p90 = scmp.ne.s32.totalorder %s75, %s89
      %p91 = scmp.eq.s32.totalorder %s23, 0
      %p92 = por %p90, %p91
      %s94 = sadd.s32 %s93, 1
      %p97 = scmp.eq.s32.totalorder %s17, 1
      %p98 = scmp.ne.s32.totalorder %s93, %s95
      %p99 = scmp.eq.s32.totalorder %s17, 0
      %p100 = por %p98, %p99
      %p101 = scmp.ne.s32.totalorder %s93, %s95
      %p102 = scmp.eq.s32.totalorder %s22, 1
      %p103 = por %p101, %p102
      %p104 = scmp.ne.s32.totalorder %s95, %s96
      %p105 = scmp.eq.s32.totalorder %s22, 0
      %p106 = por %p104, %p105
      %p107 = scmp.ne.s32.totalorder %s95, %s96
      %p108 = scmp.eq.s32.totalorder %s23, 1
      %p109 = por %p107, %p108
      %p111 = scmp.ne.s32.totalorder %s96, %s110
      %p112 = scmp.eq.s32.totalorder %s23, 0
      %p113 = por %p111, %p112
      %s115 = sadd.s32 %s114, 1
      %p118 = scmp.eq.s32.totalorder %s17, 1
      %p119 = scmp.ne.s32.totalorder %s114, %s116
      %p120 = scmp.eq.s32.totalorder %s17, 0
      %p121 = por %p119, %p120
      %p122 = scmp.ne.s32.totalorder %s114, %s116
      %p123 = scmp.eq.s32.totalorder %s22, 1
      %p124 = por %p122, %p123
      %p125 = scmp.ne.s32.totalorder %s116, %s117
      %p126 = scmp.eq.s32.totalorder %s22, 0
      %p127 = por %p125, %p126
      %p128 = scmp.ne.s32.totalorder %s116, %s117
      %p129 = scmp.eq.s32.totalorder %s23, 1
      %p130 = por %p128, %p129
      %p132 = scmp.ne.s32.totalorder %s117, %s131
      %p133 = scmp.eq.s32.totalorder %s23, 0
      %p134 = por %p132, %p133
      %s136 = sadd.s32 %s135, 1
      %p139 = scmp.eq.s32.totalorder %s17, 1
      %p140 = scmp.ne.s32.totalorder %s135, %s137
      %p141 = scmp.eq.s32.totalorder %s17, 0
      %p142 = por %p140, %p141
      %p143 = scmp.ne.s32.totalorder %s135, %s137
      %p144 = scmp.eq.s32.totalorder %s22, 1
      %p145 = por %p143, %p144
      %p146 = scmp.ne.s32.totalorder %s137, %s138
      %p147 = scmp.eq.s32.totalorder %s22, 0
      %p148 = por %p146, %p147
      %p149 = scmp.ne.s32.totalorder %s137, %s138
      %p150 = scmp.eq.s32.totalorder %s23, 1
      %p151 = por %p149, %p150
      %p153 = scmp.ne.s32.totalorder %s138, %s152
      %p154 = scmp.eq.s32.totalorder %s23, 0
      %p155 = por %p153, %p154
      %s157 = sadd.s32 %s156, 1
      %p160 = scmp.eq.s32.totalorder %s17, 1
      %p161 = scmp.ne.s32.totalorder %s156, %s158
      %p162 = scmp.eq.s32.totalorder %s17, 0
      %p163 = por %p161, %p162
      %p164 = scmp.ne.s32.totalorder %s156, %s158
      %p165 = scmp.eq.s32.totalorder %s22, 1
      %p166 = por %p164, %p165
      %p167 = scmp.ne.s32.totalorder %s158, %s159
      %p168 = scmp.eq.s32.totalorder %s22, 0
      %p169 = por %p167, %p168
      %p170 = scmp.ne.s32.totalorder %s158, %s159
      %p171 = scmp.eq.s32.totalorder %s23, 1
      %p172 = por %p170, %p171
      %p174 = scmp.ne.s32.totalorder %s159, %s173
      %p175 = scmp.eq.s32.totalorder %s23, 0
      %p176 = por %p174, %p175
      %s178 = sadd.s32 %s177, 1
      %p181 = scmp.eq.s32.totalorder %s17, 1
      %p182 = scmp.ne.s32.totalorder %s177, %s179
      %p183 = scmp.eq.s32.totalorder %s17, 0
      %p184 = por %p182, %p183
      %p185 = scmp.ne.s32.totalorder %s177, %s179
      %p186 = scmp.eq.s32.totalorder %s22, 1
      %p187 = por %p185, %p186
      %p188 = scmp.ne.s32.totalorder %s179, %s180
      %p189 = scmp.eq.s32.totalorder %s22, 0
      %p190 = por %p188, %p189
      %p191 = scmp.ne.s32.totalorder %s179, %s180
      %p192 = scmp.eq.s32.totalorder %s23, 1
      %p193 = por %p191, %p192
      %p195 = scmp.ne.s32.totalorder %s180, %s194
      %p196 = scmp.eq.s32.totalorder %s23, 0
      %p197 = por %p195, %p196
      %s198 = ssub.s32 %s17, %s24
      %p199 = scmp.eq.s32.totalorder %s198, 0
      %s201 = sadd.s32 %s200, 1
      %s202 = scalar_select %p199, %s200, %s201
      %p205 = pneg %p199
      %p206 = scmp.eq.s32.totalorder %s17, 1
      %p207 = por %p205, %p206
      %p208 = scmp.ne.s32.totalorder %s200, %s203
      %p209 = scmp.eq.s32.totalorder %s17, 0
      %p210 = por %p208, %p209
      %p211 = scmp.ne.s32.totalorder %s200, %s203
      %p212 = scmp.eq.s32.totalorder %s22, 1
      %p213 = por %p211, %p212
      %p214 = scmp.ne.s32.totalorder %s203, %s204
      %p215 = scmp.eq.s32.totalorder %s22, 0
      %p216 = por %p214, %p215
      %p217 = scmp.ne.s32.totalorder %s203, %s204
      %p218 = scmp.eq.s32.totalorder %s23, 1
      %p219 = por %p217, %p218
      %p221 = scmp.ne.s32.totalorder %s204, %s220
      %p222 = scmp.eq.s32.totalorder %s23, 0
      %p223 = por %p221, %p222
      %p224 = scmp.le.s32.totalorder 1, %s17
      %p225 = scmp.lt.s32.totalorder %s17, 3
      %p226 = pnand %p224, %p225
      %p227 = pneg %p226
      // Predicated region
      $region9: #{tpu_custom_call.1} parent=5 // pred_check
        _
      $region10: #{tpu_custom_call.1} parent=5 // pred_check_branch
        %229 = sbr.rel (%p226) target = $region12
      $region11: #{tpu_custom_call.1} parent=5 // pred_region
        %s230 = ssub.s32 %s17, 1
        // Predicated region
        $region13: #{tpu_custom_call.1} parent=11 // pred_check
          %p231 = pneg %p64
        $region14: #{tpu_custom_call.1} parent=11 // pred_check_branch
          %233 = sbr.rel (%p231) target = $region16
        $region15: #{tpu_custom_call.1} parent=11 // pred_region
          _
        $region16: #{tpu_custom_call.1} parent=11 // pred_fallthru
          _
        // Predicated region
        $region17: #{tpu_custom_call.1} parent=11 // pred_check
          %p234 = pneg %p85
        $region18: #{tpu_custom_call.1} parent=11 // pred_check_branch
          %236 = sbr.rel (%p234) target = $region20
        $region19: #{tpu_custom_call.1} parent=11 // pred_region
          _
        $region20: #{tpu_custom_call.1} parent=11 // pred_fallthru
          _
        // Predicated region
        $region21: #{tpu_custom_call.1} parent=11 // pred_check
          %p237 = pneg %p106
        $region22: #{tpu_custom_call.1} parent=11 // pred_check_branch
          %239 = sbr.rel (%p237) target = $region24
        $region23: #{tpu_custom_call.1} parent=11 // pred_region
          _
        $region24: #{tpu_custom_call.1} parent=11 // pred_fallthru
          _
        // Predicated region
        $region25: #{tpu_custom_call.1} parent=11 // pred_check
          %p240 = pneg %p127
        $region26: #{tpu_custom_call.1} parent=11 // pred_check_branch
          %242 = sbr.rel (%p240) target = $region28
        $region27: #{tpu_custom_call.1} parent=11 // pred_region
          _
        $region28: #{tpu_custom_call.1} parent=11 // pred_fallthru
          _
        // Predicated region
        $region29: #{tpu_custom_call.1} parent=11 // pred_check
          %p243 = pneg %p148
        $region30: #{tpu_custom_call.1} parent=11 // pred_check_branch
          %245 = sbr.rel (%p243) target = $region32
        $region31: #{tpu_custom_call.1} parent=11 // pred_region
          _
        $region32: #{tpu_custom_call.1} parent=11 // pred_fallthru
          _
        // Predicated region
        $region33: #{tpu_custom_call.1} parent=11 // pred_check
          %p246 = pneg %p169
        $region34: #{tpu_custom_call.1} parent=11 // pred_check_branch
          %248 = sbr.rel (%p246) target = $region36
        $region35: #{tpu_custom_call.1} parent=11 // pred_region
          _
        $region36: #{tpu_custom_call.1} parent=11 // pred_fallthru
          _
        // Predicated region
        $region37: #{tpu_custom_call.1} parent=11 // pred_check
          %p249 = pneg %p190
        $region38: #{tpu_custom_call.1} parent=11 // pred_check_branch
          %251 = sbr.rel (%p249) target = $region40
        $region39: #{tpu_custom_call.1} parent=11 // pred_region
          _
        $region40: #{tpu_custom_call.1} parent=11 // pred_fallthru
          _
      $region12: #{tpu_custom_call.1} parent=5 // pred_fallthru
        _
      %p252 = scmp.lt.s32.totalorder %s17, 2
      // Predicated region
      $region41: #{tpu_custom_call.1} parent=5 // pred_check
        %p253 = pneg %p252
      $region42: #{tpu_custom_call.1} parent=5 // pred_check_branch
        %255 = sbr.rel (%p253) target = $region44
      $region43: #{tpu_custom_call.1} parent=5 // pred_region
        // Predicated region
        $region45: #{tpu_custom_call.1} parent=43 // pred_check
          %p256 = pneg %p37
        $region46: #{tpu_custom_call.1} parent=43 // pred_check_branch
          %258 = sbr.rel (%p256) target = $region48
        $region47: #{tpu_custom_call.1} parent=43 // pred_region
          %s259 = smul.u32 2, %s17
          %p260 = scmp.lt.s32.totalorder %s259, 3
          %s261 = scalar_select %p260, %s259, 3
          %s262 = smul.addr %s261, 2
          %s263 = smul.addr %s262, 4
          %s264 = scalar_lea.vmem %s0, %s263
          %s265 = smul.u32 2, %s17
        $region48: #{tpu_custom_call.1} parent=43 // pred_fallthru
          _
      $region44: #{tpu_custom_call.1} parent=5 // pred_fallthru
        _
      %p266 = scmp.le.s32.totalorder 1, %s17
      %p267 = scmp.lt.s32.totalorder %s17, 3
      %p268 = pnand %p266, %p267
      %p269 = pneg %p268
      // Predicated region
      $region49: #{tpu_custom_call.1} parent=5 // pred_check
        _
      $region50: #{tpu_custom_call.1} parent=5 // pred_check_branch
        %271 = sbr.rel (%p268) target = $region52
      $region51: #{tpu_custom_call.1} parent=5 // pred_region
        %s272 = ssub.s32 %s17, 1
        %s273 = smul.u32 2, %s22
        %p274 = scmp.lt.s32.totalorder %s273, 3
        %s275 = scalar_select %p274, %s273, 3
        %s276 = smul.addr %s275, 2
        %s277 = smul.addr %s276, 4
        %s278 = scalar_lea.vmem %s0, %s277
        %p279 = pneg %p43
        %p280 = pneg %p40
        %p281 = pneg %p64
        %p282 = pneg %p61
        %p283 = pneg %p85
        %p284 = pneg %p82
        %p285 = pneg %p106
        %p286 = pneg %p103
        %p287 = pneg %p127
        %p288 = pneg %p124
        %p289 = pneg %p148
        %p290 = pneg %p145
        %p291 = pneg %p169
        %p292 = pneg %p166
        %p293 = pneg %p190
        %p294 = pneg %p187
        %p295 = pneg %p216
        %p296 = pneg %p213
        %s297 = sand.u32 %s203, 1
        %s298 = scalar_lea.sflag [#allocation6], %s297
        %s299 = sand.u32 %s203, 1
        %s300 = smul.addr %s299, 32
        %s301 = scalar_lea.vmem [#allocation5], %s300
        %s302 = smul.u32 2, %s22
        %p303 = scmp.lt.s32.totalorder %s302, 3
        %s304 = scalar_select %p303, %s302, 3
        %s305 = smul.addr %s304, 2
        %s306 = smul.addr %s305, 4
        %s307 = scalar_lea.vmem %s0, %s306
        %s308 = smul.u32 2, %s22
        %s309 = smul.u32 2, %s22
        %311 = vst [vmem:[#allocation2] sm:$0x3] 0
        %312 = vst [vmem:[#allocation2 + $0xa] sm:$0x3] 0
        %313 = vst [vmem:[#allocation3] sm:$0xf] 0
        %314 = vst [vmem:[#allocation3 + $0x14] sm:$0xf] 0
        %315 = vst [vmem:[#allocation4 + $0x40] sm:$0xcc] 0
        %316 = vst [vmem:[#allocation4 + $0x48] sm:$0xcc] 0
        %317 = vst [vmem:[#allocation4 + $0x50] sm:$0xff] 0
        %318 = vst [vmem:[#allocation4 + $0x58] sm:$0xff] 0
        %319 = vst [vmem:[#allocation4 + $0x90] sm:$0xff] 0
        %320 = vst [vmem:[#allocation4 + $0x98] sm:$0xff] 0
        %v321 = vld [vmem:[%s307] sm:$0xff]
        %323 = vst [vmem:[#allocation1] ss:$2 sm:$0xff] %v321
        %v324 = vld.sshfl [vmem:[#allocation1] sm:$0xff pattern:$0x75316420]
        %v325 = vld.sshfl [vmem:[#allocation1 + $0x8] sm:$0xff pattern:$0x75316420]
        %v328 = vpack.c.bf16 %v325, %v324
        %v330 = vrot.slane %v328, 2
        %vm331 = vcmask 1041408
        %v334 = vsel %vm331, %v328, %v330
        %336 = vst [vmem:[#allocation2 + $0x2] sm:$0xf] %v334
        %s337 = scalar_lea.vmem %s307, 8
        %v338 = vld [vmem:[%s337] sm:$0xff]
        %340 = vst [vmem:[#allocation1] ss:$2 sm:$0xff] %v338
        %v341 = vld.sshfl [vmem:[#allocation1] sm:$0xff pattern:$0x75316420]
        %v342 = vld.sshfl [vmem:[#allocation1 + $0x8] sm:$0xff pattern:$0x75316420]
        %v345 = vpack.c.bf16 %v342, %v341
        %v347 = vrot.slane %v345, 2
        %v350 = vsel %vm331, %v345, %v347
        %352 = vst [vmem:[#allocation2 + $0x6] sm:$0xf] %v350
        %v353 = vld [vmem:[%s5] sm:$0xf]
        %s354 = scalar_lea.vmem %s5, 4
        %v355 = vld [vmem:[%s354] sm:$0xf]
        %s356 = scalar_lea.vmem %s5, 8
        %v357 = vld [vmem:[%s356] sm:$0xf]
        %s358 = scalar_lea.vmem %s5, 12
        %v359 = vld [vmem:[%s358] sm:$0xf]
        %s360 = scalar_lea.vmem %s5, 20
        %v361 = vld [vmem:[%s360] sm:$0xf]
        %s362 = scalar_lea.vmem %s5, 24
        %v363 = vld [vmem:[%s362] sm:$0xf]
        %s364 = scalar_lea.vmem %s5, 28
        %v365 = vld [vmem:[%s364] sm:$0xf]
        %s366 = scalar_lea.vmem %s5, 32
        %v367 = vld [vmem:[%s366] sm:$0xf]
        %v368 = vld [vmem:[#allocation2] sm:$0xff]
        %v369 = vld [vmem:[#allocation2 + $0x8] sm:$0x3]
        %371 = vst [vmem:[#allocation1] ss:$9 sm:$0xff] %v353
        %v372 = vld [vmem:[#allocation1] sm:$0xff]
        %v373 = vld [vmem:[#allocation1 + $0x9] sm:$0xff]
        %v374 = vld [vmem:[#allocation1 + $0x12] sm:$0xff]
        %v375 = vld [vmem:[#allocation1 + $0x1b] sm:$0xff]
        %v376 = vpack.i.b16 %v372, %v372
        %v378 = vperm.slane %v376, 0
        %v379 = vpack.i.b16 %v373, %v373
        %v381 = vperm.slane %v379, 0
        %v382 = vpack.i.b16 %v374, %v374
        %v384 = vperm.slane %v382, 0
        %v385 = vpack.i.b16 %v375, %v375
        %v387 = vperm.slane %v385, 0
        %v388 = vunpack.c.l.bf16 %v368
        %v389 = vunpack.c.h.bf16 %v368
        %v390 = vunpack.c.l.bf16 %v369
        %v391 = vunpack.c.l.bf16 %v378
        %v392 = vunpack.c.l.bf16 %v381
        %v393 = vunpack.c.l.bf16 %v384
        %v394 = vunpack.c.l.bf16 %v387
        %v399 = vrot.slane %v392, 4
        %v400 = vrot.slane %v394, 4
        %vm401 = vcmask 1043456
        %v402 = vsel %vm401, %v391, %v399
        %v403 = vsel %vm401, %v393, %v400
        %404 = vrot.lane.b32.xlu0 %v402, 111
        %v405 = vpop.permute.xlu0 %404
        %406 = vrot.lane.b32.xlu0 %v403, 111
        %v407 = vpop.permute.xlu0 %406
        %v408 = vrot.slane %v405, 4
        %v409 = vrot.slane %v407, 4
        %vm410 = vcmask 908288
        %v411 = vsel %vm410, %v408, %v405
        %v412 = vsel %vm401, %v408, %v409
        %v413 = vsel %vm410, %v412, %v407
        %v417 = vmul.f32 %v388, %v411
        %v418 = vmul.f32 %v389, %v413
        %v419 = vmul.f32 %v390, %v409
        %423 = vst [vmem:[#allocation1] ss:$2 sm:$0xff] %v417
        %s424 = scalar_lea.vmem [#allocation1], 16
        %425 = vst [vmem:[%s424] ss:$2 sm:$0xff] %v418
        %s426 = scalar_lea.vmem [#allocation1], 32
        %427 = vst [vmem:[%s426] ss:$2 sm:$0xff] %v419
        %v428 = vld.sshfl [vmem:[#allocation1] sm:$0xff pattern:$0x75316420]
        %v429 = vld.sshfl [vmem:[#allocation1 + $0x8] sm:$0xff pattern:$0x75316420]
        %v430 = vld.sshfl [vmem:[#allocation1 + $0x10] sm:$0xff pattern:$0x75316420]
        %v431 = vld.sshfl [vmem:[#allocation1 + $0x18] sm:$0xff pattern:$0x75316420]
        %v432 = vld.sshfl [vmem:[#allocation1 + $0x20] sm:$0xff pattern:$0x75316420]
        %v438 = vpack.c.bf16 %v429, %v428
        %v439 = vpack.c.bf16 %v431, %v430
        %v440 = vpack.c.bf16 %v432, %v432
        %444 = vrot.lane.b32.xlu0 %v438, 17
        %v445 = vpop.permute.xlu0 %444
        %446 = vrot.lane.b32.xlu0 %v439, 17
        %v447 = vpop.permute.xlu0 %446
        %448 = vrot.lane.b32.xlu0 %v440, 17
        %v449 = vpop.permute.xlu0 %448
        %v450 = vrot.slane %v445, 4
        %v451 = vrot.slane %v447, 4
        %v452 = vrot.slane %v449, 4
        %vm453 = vcmask 1043456
        %v454 = vsel %vm453, %v450, %v451
        %vm455 = vcmask 138240
        %v456 = vsel %vm455, %v445, %v454
        %v457 = vsel %vm453, %v451, %v452
        %v458 = vsel %vm455, %v447, %v457
        %461 = vst [vmem:[#allocation4] sm:$0x33] %v456
        %462 = vst [vmem:[#allocation4 + $0x8] sm:$0x33] %v458
        %v463 = vld [vmem:[#allocation2] sm:$0xff]
        %v464 = vld [vmem:[#allocation2 + $0x8] sm:$0x3]
        %466 = vst [vmem:[#allocation1] ss:$9 sm:$0xff] %v355
        %v467 = vld [vmem:[#allocation1] sm:$0xff]
        %v468 = vld [vmem:[#allocation1 + $0x9] sm:$0xff]
        %v469 = vld [vmem:[#allocation1 + $0x12] sm:$0xff]
        %v470 = vld [vmem:[#allocation1 + $0x1b] sm:$0xff]
        %v471 = vpack.i.b16 %v467, %v467
        %v473 = vperm.slane %v471, 0
        %v474 = vpack.i.b16 %v468, %v468
        %v476 = vperm.slane %v474, 0
        %v477 = vpack.i.b16 %v469, %v469
        %v479 = vperm.slane %v477, 0
        %v480 = vpack.i.b16 %v470, %v470
        %v482 = vperm.slane %v480, 0
        %v483 = vunpack.c.l.bf16 %v463
        %v484 = vunpack.c.h.bf16 %v463
        %v485 = vunpack.c.l.bf16 %v464
        %v486 = vunpack.c.l.bf16 %v473
        %v487 = vunpack.c.l.bf16 %v476
        %v488 = vunpack.c.l.bf16 %v479
        %v489 = vunpack.c.l.bf16 %v482
        %v494 = vrot.slane %v487, 4
        %v495 = vrot.slane %v489, 4
        %v496 = vsel %vm401, %v486, %v494
        %v497 = vsel %vm401, %v488, %v495
        %498 = vrot.lane.b32.xlu0 %v496, 112
        %v499 = vpop.permute.xlu0 %498
        %500 = vrot.lane.b32.xlu0 %v497, 112
        %v501 = vpop.permute.xlu0 %500
        %v502 = vrot.slane %v499, 4
        %v503 = vrot.slane %v501, 4
        %vm504 = vcmask 916480
        %v505 = vsel %vm504, %v502, %v499
        %v506 = vsel %vm401, %v502, %v503
        %v507 = vsel %vm504, %v506, %v501
        %v511 = vmul.f32 %v483, %v505
        %v512 = vmul.f32 %v484, %v507
        %v513 = vmul.f32 %v485, %v503
        %517 = vst [vmem:[#allocation1] ss:$2 sm:$0xff] %v511
        %s518 = scalar_lea.vmem [#allocation1], 16
        %519 = vst [vmem:[%s518] ss:$2 sm:$0xff] %v512
        %s520 = scalar_lea.vmem [#allocation1], 32
        %521 = vst [vmem:[%s520] ss:$2 sm:$0xff] %v513
        %v522 = vld.sshfl [vmem:[#allocation1] sm:$0xff pattern:$0x75316420]
        %v523 = vld.sshfl [vmem:[#allocation1 + $0x8] sm:$0xff pattern:$0x75316420]
        %v524 = vld.sshfl [vmem:[#allocation1 + $0x10] sm:$0xff pattern:$0x75316420]
        %v525 = vld.sshfl [vmem:[#allocation1 + $0x18] sm:$0xff pattern:$0x75316420]
        %v526 = vld.sshfl [vmem:[#allocation1 + $0x20] sm:$0xff pattern:$0x75316420]
        %v532 = vpack.c.bf16 %v523, %v522
        %v533 = vpack.c.bf16 %v525, %v524
        %v534 = vpack.c.bf16 %v526, %v526
        %v538 = vrot.slane %v532, 6
        %v539 = vrot.slane %v533, 6
        %v540 = vrot.slane %v534, 6
        %541 = vrot.lane.b32.xlu0 %v538, 16
        %v542 = vpop.permute.xlu0 %541
        %543 = vrot.lane.b32.xlu0 %v539, 16
        %v544 = vpop.permute.xlu0 %543
        %545 = vrot.lane.b32.xlu0 %v540, 16
        %v546 = vpop.permute.xlu0 %545
        %v547 = vrot.slane %v542, 4
        %v548 = vrot.slane %v544, 4
        %v549 = vrot.slane %v546, 4
        %v550 = vsel %vm453, %v547, %v548
        %vm551 = vcmask 130048
        %v552 = vsel %vm551, %v542, %v550
        %v553 = vsel %vm453, %v548, %v549
        %v554 = vsel %vm551, %v544, %v553
        %557 = vst [vmem:[#allocation4] sm:$0xcc] %v552
        %558 = vst [vmem:[#allocation4 + $0x8] sm:$0xcc] %v554
        %v559 = vld [vmem:[#allocation2] sm:$0xff]
        %v560 = vld [vmem:[#allocation2 + $0x8] sm:$0x3]
        %562 = vst [vmem:[#allocation1] ss:$9 sm:$0xff] %v357
        %v563 = vld [vmem:[#allocation1] sm:$0xff]
        %v564 = vld [vmem:[#allocation1 + $0x9] sm:$0xff]
        %v565 = vld [vmem:[#allocation1 + $0x12] sm:$0xff]
        %v566 = vld [vmem:[#allocation1 + $0x1b] sm:$0xff]
        %v567 = vpack.i.b16 %v563, %v563
        %v569 = vperm.slane %v567, 0
        %v570 = vpack.i.b16 %v564, %v564
        %v572 = vperm.slane %v570, 0
        %v573 = vpack.i.b16 %v565, %v565
        %v575 = vperm.slane %v573, 0
        %v576 = vpack.i.b16 %v566, %v566
        %v578 = vperm.slane %v576, 0
        %v579 = vunpack.c.l.bf16 %v559
        %v580 = vunpack.c.h.bf16 %v559
        %v581 = vunpack.c.l.bf16 %v560
        %v582 = vunpack.c.l.bf16 %v569
        %v583 = vunpack.c.l.bf16 %v572
        %v584 = vunpack.c.l.bf16 %v575
        %v585 = vunpack.c.l.bf16 %v578
        %v590 = vrot.slane %v583, 4
        %v591 = vrot.slane %v585, 4
        %v592 = vsel %vm401, %v582, %v590
        %v593 = vsel %vm401, %v584, %v591
        %594 = vrot.lane.b32.xlu0 %v592, 113
        %v595 = vpop.permute.xlu0 %594
        %596 = vrot.lane.b32.xlu0 %v593, 113
        %v597 = vpop.permute.xlu0 %596
        %v598 = vrot.slane %v595, 4
        %v599 = vrot.slane %v597, 4
        %vm600 = vcmask 924672
        %v601 = vsel %vm600, %v598, %v595
        %v602 = vsel %vm401, %v598, %v599
        %v603 = vsel %vm600, %v602, %v597
        %v607 = vmul.f32 %v579, %v601
        %v608 = vmul.f32 %v580, %v603
        %v609 = vmul.f32 %v581, %v599
        %613 = vst [vmem:[#allocation1] ss:$2 sm:$0xff] %v607
        %s614 = scalar_lea.vmem [#allocation1], 16
        %615 = vst [vmem:[%s614] ss:$2 sm:$0xff] %v608
        %s616 = scalar_lea.vmem [#allocation1], 32
        %617 = vst [vmem:[%s616] ss:$2 sm:$0xff] %v609
        %v618 = vld.sshfl [vmem:[#allocation1] sm:$0xff pattern:$0x75316420]
        %v619 = vld.sshfl [vmem:[#allocation1 + $0x8] sm:$0xff pattern:$0x75316420]
        %v620 = vld.sshfl [vmem:[#allocation1 + $0x10] sm:$0xff pattern:$0x75316420]
        %v621 = vld.sshfl [vmem:[#allocation1 + $0x18] sm:$0xff pattern:$0x75316420]
        %v622 = vld.sshfl [vmem:[#allocation1 + $0x20] sm:$0xff pattern:$0x75316420]
        %v628 = vpack.c.bf16 %v619, %v618
        %v629 = vpack.c.bf16 %v621, %v620
        %v630 = vpack.c.bf16 %v622, %v622
        %634 = vrot.lane.b32.xlu0 %v628, 15
        %v635 = vpop.permute.xlu0 %634
        %636 = vrot.lane.b32.xlu0 %v629, 15
        %v637 = vpop.permute.xlu0 %636
        %638 = vrot.lane.b32.xlu0 %v630, 15
        %v639 = vpop.permute.xlu0 %638
        %v640 = vrot.slane %v635, 4
        %v641 = vrot.slane %v637, 4
        %v642 = vrot.slane %v639, 4
        %v643 = vsel %vm453, %v640, %v641
        %vm644 = vcmask 121856
        %v645 = vsel %vm644, %v635, %v643
        %v646 = vsel %vm453, %v641, %v642
        %v647 = vsel %vm644, %v637, %v646
        %650 = vst [vmem:[#allocation4 + $0x10] sm:$0x33] %v645
        %651 = vst [vmem:[#allocation4 + $0x18] sm:$0x33] %v647
        %v652 = vld [vmem:[#allocation2] sm:$0xff]
        %v653 = vld [vmem:[#allocation2 + $0x8] sm:$0x3]
        %655 = vst [vmem:[#allocation1] ss:$9 sm:$0xff] %v359
        %v656 = vld [vmem:[#allocation1] sm:$0xff]
        %v657 = vld [vmem:[#allocation1 + $0x9] sm:$0xff]
        %v658 = vld [vmem:[#allocation1 + $0x12] sm:$0xff]
        %v659 = vld [vmem:[#allocation1 + $0x1b] sm:$0xff]
        %v660 = vpack.i.b16 %v656, %v656
        %v662 = vperm.slane %v660, 0
        %v663 = vpack.i.b16 %v657, %v657
        %v665 = vperm.slane %v663, 0
        %v666 = vpack.i.b16 %v658, %v658
        %v668 = vperm.slane %v666, 0
        %v669 = vpack.i.b16 %v659, %v659
        %v671 = vperm.slane %v669, 0
        %v672 = vunpack.c.l.bf16 %v652
        %v673 = vunpack.c.h.bf16 %v652
        %v674 = vunpack.c.l.bf16 %v653
        %v675 = vunpack.c.l.bf16 %v662
        %v676 = vunpack.c.l.bf16 %v665
        %v677 = vunpack.c.l.bf16 %v668
        %v678 = vunpack.c.l.bf16 %v671
        %v683 = vrot.slane %v676, 4
        %v684 = vrot.slane %v678, 4
        %v685 = vsel %vm401, %v675, %v683
        %v686 = vsel %vm401, %v677, %v684
        %687 = vrot.lane.b32.xlu0 %v685, 127
        %v688 = vpop.permute.xlu0 %687
        %689 = vrot.lane.b32.xlu0 %v686, 127
        %v690 = vpop.permute.xlu0 %689
        %v691 = vrot.slane %v688, 4
        %v692 = vrot.slane %v690, 4
        %vm693 = vcmask 1039360
        %v694 = vsel %vm693, %v691, %v688
        %v695 = vsel %vm401, %v691, %v692
        %v696 = vsel %vm693, %v695, %v690
        %v700 = vmul.f32 %v672, %v694
        %v701 = vmul.f32 %v673, %v696
        %v702 = vmul.f32 %v674, %v692
        %706 = vst [vmem:[#allocation1] ss:$2 sm:$0xff] %v700
        %s707 = scalar_lea.vmem [#allocation1], 16
        %708 = vst [vmem:[%s707] ss:$2 sm:$0xff] %v701
        %s709 = scalar_lea.vmem [#allocation1], 32
        %710 = vst [vmem:[%s709] ss:$2 sm:$0xff] %v702
        %v711 = vld.sshfl [vmem:[#allocation1] sm:$0xff pattern:$0x75316420]
        %v712 = vld.sshfl [vmem:[#allocation1 + $0x8] sm:$0xff pattern:$0x75316420]
        %v713 = vld.sshfl [vmem:[#allocation1 + $0x10] sm:$0xff pattern:$0x75316420]
        %v714 = vld.sshfl [vmem:[#allocation1 + $0x18] sm:$0xff pattern:$0x75316420]
        %v715 = vld.sshfl [vmem:[#allocation1 + $0x20] sm:$0xff pattern:$0x75316420]
        %v721 = vpack.c.bf16 %v712, %v711
        %v722 = vpack.c.bf16 %v714, %v713
        %v723 = vpack.c.bf16 %v715, %v715
        %v727 = vrot.slane %v721, 6
        %v728 = vrot.slane %v722, 6
        %v729 = vrot.slane %v723, 6
        %730 = vrot.lane.b32.xlu0 %v727, 1
        %v731 = vpop.permute.xlu0 %730
        %732 = vrot.lane.b32.xlu0 %v728, 1
        %v733 = vpop.permute.xlu0 %732
        %734 = vrot.lane.b32.xlu0 %v729, 1
        %v735 = vpop.permute.xlu0 %734
        %v736 = vrot.slane %v731, 4
        %v737 = vrot.slane %v733, 4
        %v738 = vrot.slane %v735, 4
        %v739 = vsel %vm453, %v736, %v737
        %vm740 = vcmask 7168
        %v741 = vsel %vm740, %v731, %v739
        %v742 = vsel %vm453, %v737, %v738
        %v743 = vsel %vm740, %v733, %v742
        %746 = vst [vmem:[#allocation4 + $0x10] sm:$0xcc] %v741
        %747 = vst [vmem:[#allocation4 + $0x18] sm:$0xcc] %v743
        %v748 = vld [vmem:[#allocation2 + $0x2] sm:$0xff]
        %750 = vst [vmem:[#allocation1] ss:$2 sm:$0xff] %v748
        %v751 = vld.sshfl [vmem:[#allocation1] sm:$0xff pattern:$0x75643120]
        %v752 = vld.sshfl [vmem:[#allocation1 + $0x8] sm:$0xff pattern:$0x75643120]
        %755 = vst [vmem:[#allocation4 + $0x20] sm:$0x33] %v751
        %756 = vst [vmem:[#allocation4 + $0x28] sm:$0x33] %v752
        %v757 = vld [vmem:[#allocation2 + $0x2] sm:$0xff]
        %v758 = vld [vmem:[#allocation2 + $0xa] sm:$0x3]
        %760 = vst [vmem:[#allocation1] ss:$9 sm:$0xff] %v361
        %v761 = vld [vmem:[#allocation1] sm:$0xff]
        %v762 = vld [vmem:[#allocation1 + $0x9] sm:$0xff]
        %v763 = vld [vmem:[#allocation1 + $0x12] sm:$0xff]
        %v764 = vld [vmem:[#allocation1 + $0x1b] sm:$0xff]
        %v765 = vpack.i.b16 %v761, %v761
        %v767 = vperm.slane %v765, 0
        %v768 = vpack.i.b16 %v762, %v762
        %v770 = vperm.slane %v768, 0
        %v771 = vpack.i.b16 %v763, %v763
        %v773 = vperm.slane %v771, 0
        %v774 = vpack.i.b16 %v764, %v764
        %v776 = vperm.slane %v774, 0
        %v777 = vunpack.c.l.bf16 %v757
        %v778 = vunpack.c.h.bf16 %v757
        %v779 = vunpack.c.l.bf16 %v758
        %v780 = vunpack.c.l.bf16 %v767
        %v781 = vunpack.c.l.bf16 %v770
        %v782 = vunpack.c.l.bf16 %v773
        %v783 = vunpack.c.l.bf16 %v776
        %v788 = vrot.slane %v781, 4
        %v789 = vrot.slane %v783, 4
        %v790 = vsel %vm401, %v780, %v788
        %v791 = vsel %vm401, %v782, %v789
        %792 = vrot.lane.b32.xlu0 %v790, 1
        %v793 = vpop.permute.xlu0 %792
        %794 = vrot.lane.b32.xlu0 %v791, 1
        %v795 = vpop.permute.xlu0 %794
        %v796 = vrot.slane %v793, 4
        %v797 = vrot.slane %v795, 4
        %vm798 = vcmask 7168
        %v799 = vsel %vm798, %v796, %v793
        %v800 = vsel %vm401, %v796, %v797
        %v801 = vsel %vm798, %v800, %v795
        %v805 = vmul.f32 %v777, %v799
        %v806 = vmul.f32 %v778, %v801
        %v807 = vmul.f32 %v779, %v797
        %811 = vst [vmem:[#allocation1] ss:$2 sm:$0xff] %v805
        %s812 = scalar_lea.vmem [#allocation1], 16
        %813 = vst [vmem:[%s812] ss:$2 sm:$0xff] %v806
        %s814 = scalar_lea.vmem [#allocation1], 32
        %815 = vst [vmem:[%s814] ss:$2 sm:$0xff] %v807
        %v816 = vld.sshfl [vmem:[#allocation1] sm:$0xff pattern:$0x75316420]
        %v817 = vld.sshfl [vmem:[#allocation1 + $0x8] sm:$0xff pattern:$0x75316420]
        %v818 = vld.sshfl [vmem:[#allocation1 + $0x10] sm:$0xff pattern:$0x75316420]
        %v819 = vld.sshfl [vmem:[#allocation1 + $0x18] sm:$0xff pattern:$0x75316420]
        %v820 = vld.sshfl [vmem:[#allocation1 + $0x20] sm:$0xff pattern:$0x75316420]
        %v826 = vpack.c.bf16 %v817, %v816
        %v827 = vpack.c.bf16 %v819, %v818
        %v828 = vpack.c.bf16 %v820, %v820
        %v832 = vrot.slane %v826, 6
        %v833 = vrot.slane %v827, 6
        %v834 = vrot.slane %v828, 6
        %835 = vrot.lane.b32.xlu0 %v832, 127
        %v836 = vpop.permute.xlu0 %835
        %837 = vrot.lane.b32.xlu0 %v833, 127
        %v838 = vpop.permute.xlu0 %837
        %839 = vrot.lane.b32.xlu0 %v834, 127
        %v840 = vpop.permute.xlu0 %839
        %v841 = vrot.slane %v836, 4
        %v842 = vrot.slane %v838, 4
        %v843 = vrot.slane %v840, 4
        %v844 = vsel %vm453, %v841, %v842
        %vm845 = vcmask 1039360
        %v846 = vsel %vm845, %v836, %v844
        %v847 = vsel %vm453, %v842, %v843
        %v848 = vsel %vm845, %v838, %v847
        %851 = vst [vmem:[#allocation4 + $0x20] sm:$0xcc] %v846
        %852 = vst [vmem:[#allocation4 + $0x28] sm:$0xcc] %v848
        %v853 = vld [vmem:[#allocation2 + $0x2] sm:$0xff]
        %v854 = vld [vmem:[#allocation2 + $0xa] sm:$0x3]
        %856 = vst [vmem:[#allocation1] ss:$9 sm:$0xff] %v363
        %v857 = vld [vmem:[#allocation1] sm:$0xff]
        %v858 = vld [vmem:[#allocation1 + $0x9] sm:$0xff]
        %v859 = vld [vmem:[#allocation1 + $0x12] sm:$0xff]
        %v860 = vld [vmem:[#allocation1 + $0x1b] sm:$0xff]
        %v861 = vpack.i.b16 %v857, %v857
        %v863 = vperm.slane %v861, 0
        %v864 = vpack.i.b16 %v858, %v858
        %v866 = vperm.slane %v864, 0
        %v867 = vpack.i.b16 %v859, %v859
        %v869 = vperm.slane %v867, 0
        %v870 = vpack.i.b16 %v860, %v860
        %v872 = vperm.slane %v870, 0
        %v873 = vunpack.c.l.bf16 %v853
        %v874 = vunpack.c.h.bf16 %v853
        %v875 = vunpack.c.l.bf16 %v854
        %v876 = vunpack.c.l.bf16 %v863
        %v877 = vunpack.c.l.bf16 %v866
        %v878 = vunpack.c.l.bf16 %v869
        %v879 = vunpack.c.l.bf16 %v872
        %v884 = vrot.slane %v877, 4
        %v885 = vrot.slane %v879, 4
        %v886 = vsel %vm401, %v876, %v884
        %v887 = vsel %vm401, %v878, %v885
        %888 = vrot.lane.b32.xlu0 %v886, 15
        %v889 = vpop.permute.xlu0 %888
        %890 = vrot.lane.b32.xlu0 %v887, 15
        %v891 = vpop.permute.xlu0 %890
        %v892 = vrot.slane %v889, 4
        %v893 = vrot.slane %v891, 4
        %vm894 = vcmask 121856
        %v895 = vsel %vm894, %v892, %v889
        %v896 = vsel %vm401, %v892, %v893
        %v897 = vsel %vm894, %v896, %v891
        %v901 = vmul.f32 %v873, %v895
        %v902 = vmul.f32 %v874, %v897
        %v903 = vmul.f32 %v875, %v893
        %907 = vst [vmem:[#allocation1] ss:$2 sm:$0xff] %v901
        %s908 = scalar_lea.vmem [#allocation1], 16
        %909 = vst [vmem:[%s908] ss:$2 sm:$0xff] %v902
        %s910 = scalar_lea.vmem [#allocation1], 32
        %911 = vst [vmem:[%s910] ss:$2 sm:$0xff] %v903
        %v912 = vld.sshfl [vmem:[#allocation1] sm:$0xff pattern:$0x75316420]
        %v913 = vld.sshfl [vmem:[#allocation1 + $0x8] sm:$0xff pattern:$0x75316420]
        %v914 = vld.sshfl [vmem:[#allocation1 + $0x10] sm:$0xff pattern:$0x75316420]
        %v915 = vld.sshfl [vmem:[#allocation1 + $0x18] sm:$0xff pattern:$0x75316420]
        %v916 = vld.sshfl [vmem:[#allocation1 + $0x20] sm:$0xff pattern:$0x75316420]
        %v922 = vpack.c.bf16 %v913, %v912
        %v923 = vpack.c.bf16 %v915, %v914
        %v924 = vpack.c.bf16 %v916, %v916
        %928 = vrot.lane.b32.xlu0 %v922, 113
        %v929 = vpop.permute.xlu0 %928
        %930 = vrot.lane.b32.xlu0 %v923, 113
        %v931 = vpop.permute.xlu0 %930
        %932 = vrot.lane.b32.xlu0 %v924, 113
        %v933 = vpop.permute.xlu0 %932
        %v934 = vrot.slane %v929, 4
        %v935 = vrot.slane %v931, 4
        %v936 = vrot.slane %v933, 4
        %v937 = vsel %vm453, %v934, %v935
        %vm938 = vcmask 924672
        %v939 = vsel %vm938, %v929, %v937
        %v940 = vsel %vm453, %v935, %v936
        %v941 = vsel %vm938, %v931, %v940
        %944 = vst [vmem:[#allocation4 + $0x30] sm:$0x33] %v939
        %945 = vst [vmem:[#allocation4 + $0x38] sm:$0x33] %v941
        %v946 = vld [vmem:[#allocation2 + $0x2] sm:$0xff]
        %v947 = vld [vmem:[#allocation2 + $0xa] sm:$0x3]
        %949 = vst [vmem:[#allocation1] ss:$9 sm:$0xff] %v365
        %v950 = vld [vmem:[#allocation1] sm:$0xff]
        %v951 = vld [vmem:[#allocation1 + $0x9] sm:$0xff]
        %v952 = vld [vmem:[#allocation1 + $0x12] sm:$0xff]
        %v953 = vld [vmem:[#allocation1 + $0x1b] sm:$0xff]
        %v954 = vpack.i.b16 %v950, %v950
        %v956 = vperm.slane %v954, 0
        %v957 = vpack.i.b16 %v951, %v951
        %v959 = vperm.slane %v957, 0
        %v960 = vpack.i.b16 %v952, %v952
        %v962 = vperm.slane %v960, 0
        %v963 = vpack.i.b16 %v953, %v953
        %v965 = vperm.slane %v963, 0
        %v966 = vunpack.c.l.bf16 %v946
        %v967 = vunpack.c.h.bf16 %v946
        %v968 = vunpack.c.l.bf16 %v947
        %v969 = vunpack.c.l.bf16 %v956
        %v970 = vunpack.c.l.bf16 %v959
        %v971 = vunpack.c.l.bf16 %v962
        %v972 = vunpack.c.l.bf16 %v965
        %v977 = vrot.slane %v970, 4
        %v978 = vrot.slane %v972, 4
        %v979 = vsel %vm401, %v969, %v977
        %v980 = vsel %vm401, %v971, %v978
        %981 = vrot.lane.b32.xlu0 %v979, 16
        %v982 = vpop.permute.xlu0 %981
        %983 = vrot.lane.b32.xlu0 %v980, 16
        %v984 = vpop.permute.xlu0 %983
        %v985 = vrot.slane %v982, 4
        %v986 = vrot.slane %v984, 4
        %vm987 = vcmask 130048
        %v988 = vsel %vm987, %v985, %v982
        %v989 = vsel %vm401, %v985, %v986
        %v990 = vsel %vm987, %v989, %v984
        %v994 = vmul.f32 %v966, %v988
        %v995 = vmul.f32 %v967, %v990
        %v996 = vmul.f32 %v968, %v986
        %1000 = vst [vmem:[#allocation1] ss:$2 sm:$0xff] %v994
        %s1001 = scalar_lea.vmem [#allocation1], 16
        %1002 = vst [vmem:[%s1001] ss:$2 sm:$0xff] %v995
        %s1003 = scalar_lea.vmem [#allocation1], 32
        %1004 = vst [vmem:[%s1003] ss:$2 sm:$0xff] %v996
        %v1005 = vld.sshfl [vmem:[#allocation1] sm:$0xff pattern:$0x75316420]
        %v1006 = vld.sshfl [vmem:[#allocation1 + $0x8] sm:$0xff pattern:$0x75316420]
        %v1007 = vld.sshfl [vmem:[#allocation1 + $0x10] sm:$0xff pattern:$0x75316420]
        %v1008 = vld.sshfl [vmem:[#allocation1 + $0x18] sm:$0xff pattern:$0x75316420]
        %v1009 = vld.sshfl [vmem:[#allocation1 + $0x20] sm:$0xff pattern:$0x75316420]
        %v1015 = vpack.c.bf16 %v1006, %v1005
        %v1016 = vpack.c.bf16 %v1008, %v1007
        %v1017 = vpack.c.bf16 %v1009, %v1009
        %v1021 = vrot.slane %v1015, 6
        %v1022 = vrot.slane %v1016, 6
        %v1023 = vrot.slane %v1017, 6
        %1024 = vrot.lane.b32.xlu0 %v1021, 112
        %v1025 = vpop.permute.xlu0 %1024
        %1026 = vrot.lane.b32.xlu0 %v1022, 112
        %v1027 = vpop.permute.xlu0 %1026
        %1028 = vrot.lane.b32.xlu0 %v1023, 112
        %v1029 = vpop.permute.xlu0 %1028
        %v1030 = vrot.slane %v1025, 4
        %v1031 = vrot.slane %v1027, 4
        %v1032 = vrot.slane %v1029, 4
        %v1033 = vsel %vm453, %v1030, %v1031
        %vm1034 = vcmask 916480
        %v1035 = vsel %vm1034, %v1025, %v1033
        %v1036 = vsel %vm453, %v1031, %v1032
        %v1037 = vsel %vm1034, %v1027, %v1036
        %1040 = vst [vmem:[#allocation4 + $0x30] sm:$0xcc] %v1035
        %1041 = vst [vmem:[#allocation4 + $0x38] sm:$0xcc] %v1037
        %v1042 = vld [vmem:[#allocation2 + $0x2] sm:$0xff]
        %v1043 = vld [vmem:[#allocation2 + $0xa] sm:$0x3]
        %1045 = vst [vmem:[#allocation1] ss:$9 sm:$0xff] %v367
        %v1046 = vld [vmem:[#allocation1] sm:$0xff]
        %v1047 = vld [vmem:[#allocation1 + $0x9] sm:$0xff]
        %v1048 = vld [vmem:[#allocation1 + $0x12] sm:$0xff]
        %v1049 = vld [vmem:[#allocation1 + $0x1b] sm:$0xff]
        %v1050 = vpack.i.b16 %v1046, %v1046
        %v1052 = vperm.slane %v1050, 0
        %v1053 = vpack.i.b16 %v1047, %v1047
        %v1055 = vperm.slane %v1053, 0
        %v1056 = vpack.i.b16 %v1048, %v1048
        %v1058 = vperm.slane %v1056, 0
        %v1059 = vpack.i.b16 %v1049, %v1049
        %v1061 = vperm.slane %v1059, 0
        %v1062 = vunpack.c.l.bf16 %v1042
        %v1063 = vunpack.c.h.bf16 %v1042
        %v1064 = vunpack.c.l.bf16 %v1043
        %v1065 = vunpack.c.l.bf16 %v1052
        %v1066 = vunpack.c.l.bf16 %v1055
        %v1067 = vunpack.c.l.bf16 %v1058
        %v1068 = vunpack.c.l.bf16 %v1061
        %v1073 = vrot.slane %v1066, 4
        %v1074 = vrot.slane %v1068, 4
        %v1075 = vsel %vm401, %v1065, %v1073
        %v1076 = vsel %vm401, %v1067, %v1074
        %1077 = vrot.lane.b32.xlu0 %v1075, 17
        %v1078 = vpop.permute.xlu0 %1077
        %1079 = vrot.lane.b32.xlu0 %v1076, 17
        %v1080 = vpop.permute.xlu0 %1079
        %v1081 = vrot.slane %v1078, 4
        %v1082 = vrot.slane %v1080, 4
        %vm1083 = vcmask 138240
        %v1084 = vsel %vm1083, %v1081, %v1078
        %v1085 = vsel %vm401, %v1081, %v1082
        %v1086 = vsel %vm1083, %v1085, %v1080
        %v1090 = vmul.f32 %v1062, %v1084
        %v1091 = vmul.f32 %v1063, %v1086
        %v1092 = vmul.f32 %v1064, %v1082
        %1096 = vst [vmem:[#allocation1] ss:$2 sm:$0xff] %v1090
        %s1097 = scalar_lea.vmem [#allocation1], 16
        %1098 = vst [vmem:[%s1097] ss:$2 sm:$0xff] %v1091
        %s1099 = scalar_lea.vmem [#allocation1], 32
        %1100 = vst [vmem:[%s1099] ss:$2 sm:$0xff] %v1092
        %v1101 = vld.sshfl [vmem:[#allocation1] sm:$0xff pattern:$0x75316420]
        %v1102 = vld.sshfl [vmem:[#allocation1 + $0x8] sm:$0xff pattern:$0x75316420]
        %v1103 = vld.sshfl [vmem:[#allocation1 + $0x10] sm:$0xff pattern:$0x75316420]
        %v1104 = vld.sshfl [vmem:[#allocation1 + $0x18] sm:$0xff pattern:$0x75316420]
        %v1105 = vld.sshfl [vmem:[#allocation1 + $0x20] sm:$0xff pattern:$0x75316420]
        %v1111 = vpack.c.bf16 %v1102, %v1101
        %v1112 = vpack.c.bf16 %v1104, %v1103
        %v1113 = vpack.c.bf16 %v1105, %v1105
        %1117 = vrot.lane.b32.xlu0 %v1111, 111
        %v1118 = vpop.permute.xlu0 %1117
        %1119 = vrot.lane.b32.xlu0 %v1112, 111
        %v1120 = vpop.permute.xlu0 %1119
        %1121 = vrot.lane.b32.xlu0 %v1113, 111
        %v1122 = vpop.permute.xlu0 %1121
        %v1123 = vrot.slane %v1118, 4
        %v1124 = vrot.slane %v1120, 4
        %v1125 = vrot.slane %v1122, 4
        %v1126 = vsel %vm453, %v1123, %v1124
        %vm1127 = vcmask 908288
        %v1128 = vsel %vm1127, %v1118, %v1126
        %v1129 = vsel %vm453, %v1124, %v1125
        %v1130 = vsel %vm1127, %v1120, %v1129
        %1133 = vst [vmem:[#allocation4 + $0x40] sm:$0x33] %v1128
        %1134 = vst [vmem:[#allocation4 + $0x48] sm:$0x33] %v1130
        %v1135 = vld [vmem:[%s1] sm:$0xf]
        %v1136 = vld [vmem:[#allocation4] sm:$0xff]
        %v1137 = vld [vmem:[#allocation4 + $0x8] sm:$0xff]
        %v1138 = vld [vmem:[#allocation4 + $0x10] sm:$0xff]
        %v1139 = vld [vmem:[#allocation4 + $0x18] sm:$0xff]
        %v1140 = vld [vmem:[#allocation4 + $0x20] sm:$0xff]
        %v1141 = vld [vmem:[#allocation4 + $0x28] sm:$0xff]
        %v1142 = vld [vmem:[#allocation4 + $0x30] sm:$0xff]
        %v1143 = vld [vmem:[#allocation4 + $0x38] sm:$0xff]
        %v1144 = vld [vmem:[#allocation4 + $0x40] sm:$0xff]
        %v1145 = vld [vmem:[#allocation4 + $0x48] sm:$0xff]
        %v1146 = vld [vmem:[#allocation4 + $0x50] sm:$0xff]
        %v1147 = vld [vmem:[#allocation4 + $0x58] sm:$0xff]
        %v1148 = vld [vmem:[%s2] sm:$0xff]
        %1150 = vset.pattern.permute.xlu0 0
        %1151 = vperm.xlu0 %1150, %v1148
        %v1152 = vpop.permute.xlu0 %1151
        %v1166 = vunpack.c.l.b16 %v1136
        %v1167 = vunpack.c.h.b16 %v1136
        %v1168 = vunpack.c.l.b16 %v1137
        %v1169 = vunpack.c.h.b16 %v1137
        %v1170 = vunpack.c.l.b16 %v1138
        %v1171 = vunpack.c.h.b16 %v1138
        %v1172 = vunpack.c.l.b16 %v1139
        %v1173 = vunpack.c.h.b16 %v1139
        %v1174 = vunpack.c.l.b16 %v1140
        %v1175 = vunpack.c.h.b16 %v1140
        %v1176 = vunpack.c.l.b16 %v1141
        %v1177 = vunpack.c.h.b16 %v1141
        %v1178 = vunpack.c.l.b16 %v1142
        %v1179 = vunpack.c.h.b16 %v1142
        %v1180 = vunpack.c.l.b16 %v1143
        %v1181 = vunpack.c.h.b16 %v1143
        %v1182 = vunpack.c.l.b16 %v1144
        %v1183 = vunpack.c.h.b16 %v1144
        %v1184 = vunpack.c.l.b16 %v1145
        %v1185 = vunpack.c.h.b16 %v1145
        %v1186 = vunpack.c.l.b16 %v1146
        %v1187 = vunpack.c.h.b16 %v1146
        %v1188 = vunpack.c.l.b16 %v1147
        %v1189 = vunpack.c.h.b16 %v1147
        %v1190 = vpack.c.b16 %v1170, %v1166
        %v1191 = vpack.c.b16 %v1171, %v1167
        %v1192 = vpack.c.b16 %v1172, %v1168
        %v1193 = vpack.c.b16 %v1173, %v1169
        %v1194 = vpack.c.b16 %v1178, %v1174
        %v1195 = vpack.c.b16 %v1179, %v1175
        %v1196 = vpack.c.b16 %v1180, %v1176
        %v1197 = vpack.c.b16 %v1181, %v1177
        %v1198 = vpack.c.b16 %v1186, %v1182
        %v1199 = vpack.c.b16 %v1187, %v1183
        %v1200 = vpack.c.b16 %v1188, %v1184
        %v1201 = vpack.c.b16 %v1189, %v1185
        %vm1214 = vcmask 392192
        %v1216 = vsel %vm1214, %v1135, 0
        %1218 = vmatpush.bf16.msra.mxu0 0
        %1219 = vmatpush.bf16.msra.mxu0 0
        %1220 = vmatpush.bf16.msra.mxu0 0
        %1221 = vmatpush.bf16.msra.mxu0 0
        %1222 = vmatpush.bf16.msra.mxu0 0
        %1223 = vmatpush.bf16.msra.mxu0 %v1198
        %1224 = vmatpush.bf16.msra.mxu0 %v1194
        %1225 = vmatpush.bf16.msra.mxu0 %v1190
        %1226 = vmatmul.bf16.gmra.mxu0 %v1216
        %v1227 = vpop.f32.mrf.mxu0
        %v1228 = vadd.f32 %v1152, %v1227
        %v1229 = vpop.f32.mrf.mxu0
        %1230 = vdwg.mxu0
        %1231 = vmatpush.bf16.msra.mxu0 0
        %1232 = vmatpush.bf16.msra.mxu0 0
        %1233 = vmatpush.bf16.msra.mxu0 0
        %1234 = vmatpush.bf16.msra.mxu0 0
        %1235 = vmatpush.bf16.msra.mxu0 0
        %1236 = vmatpush.bf16.msra.mxu0 %v1199
        %1237 = vmatpush.bf16.msra.mxu0 %v1195
        %1238 = vmatpush.bf16.msra.mxu0 %v1191
        %1239 = vmatmul.bf16.gmra.mxu0 %v1216
        %v1240 = vpop.f32.mrf.mxu0
        %v1241 = vadd.f32 %v1152, %v1240
        %v1242 = vpop.f32.mrf.mxu0
        %1243 = vdwg.mxu0
        %1244 = vmatpush.bf16.msra.mxu0 0
        %1245 = vmatpush.bf16.msra.mxu0 0
        %1246 = vmatpush.bf16.msra.mxu0 0
        %1247 = vmatpush.bf16.msra.mxu0 0
        %1248 = vmatpush.bf16.msra.mxu0 0
        %1249 = vmatpush.bf16.msra.mxu0 %v1200
        %1250 = vmatpush.bf16.msra.mxu0 %v1196
        %1251 = vmatpush.bf16.msra.mxu0 %v1192
        %1252 = vmatmul.bf16.gmra.mxu0 %v1216
        %v1253 = vpop.f32.mrf.mxu0
        %v1254 = vadd.f32 %v1152, %v1253
        %v1255 = vpop.f32.mrf.mxu0
        %1256 = vdwg.mxu0
        %1257 = vmatpush.bf16.msra.mxu0 0
        %1258 = vmatpush.bf16.msra.mxu0 0
        %1259 = vmatpush.bf16.msra.mxu0 0
        %1260 = vmatpush.bf16.msra.mxu0 0
        %1261 = vmatpush.bf16.msra.mxu0 0
        %1262 = vmatpush.bf16.msra.mxu0 %v1201
        %1263 = vmatpush.bf16.msra.mxu0 %v1197
        %1264 = vmatpush.bf16.msra.mxu0 %v1193
        %1265 = vmatmul.bf16.gmra.mxu0 %v1216
        %v1266 = vpop.f32.mrf.mxu0
        %v1267 = vadd.f32 %v1152, %v1266
        %v1268 = vpop.f32.mrf.mxu0
        %1269 = vdwg.mxu0
        %v1270 = vmax.f32 %v1228, 0.0
        %v1271 = vmax.f32 %v1241, 0.0
        %v1272 = vmax.f32 %v1254, 0.0
        %v1273 = vmax.f32 %v1267, 0.0
        %v1274 = vpack.c.bf16 %v1271, %v1270
        %v1275 = vpack.c.bf16 %v1273, %v1272
        %1276 = vst [vmem:[#allocation3 + $0x4] sm:$0xff] %v1274
        %1277 = vst [vmem:[#allocation3 + $0xc] sm:$0xff] %v1275
        %v1278 = vld [vmem:[#allocation3] sm:$0xff]
        %v1279 = vld [vmem:[#allocation3 + $0x8] sm:$0xff]
        %v1280 = vld [vmem:[#allocation3 + $0x10] sm:$0xf]
        %1281 = vst [vmem:[#allocation1] ss:$9 sm:$0xff] %v353
        %v1282 = vld [vmem:[#allocation1] sm:$0xff]
        %v1283 = vld [vmem:[#allocation1 + $0x9] sm:$0xff]
        %v1284 = vld [vmem:[#allocation1 + $0x12] sm:$0xff]
        %v1285 = vld [vmem:[#allocation1 + $0x1b] sm:$0xff]
        %v1286 = vpack.i.b16 %v1282, %v1282
        %v1288 = vperm.slane %v1286, 0
        %v1289 = vpack.i.b16 %v1283, %v1283
        %v1291 = vperm.slane %v1289, 0
        %v1292 = vpack.i.b16 %v1284, %v1284
        %v1294 = vperm.slane %v1292, 0
        %v1295 = vpack.i.b16 %v1285, %v1285
        %v1297 = vperm.slane %v1295, 0
        %v1298 = vunpack.c.l.bf16 %v1278
        %v1299 = vunpack.c.h.bf16 %v1278
        %v1300 = vunpack.c.l.bf16 %v1279
        %v1301 = vunpack.c.h.bf16 %v1279
        %v1302 = vunpack.c.l.bf16 %v1280
        %v1303 = vunpack.c.l.bf16 %v1288
        %v1304 = vunpack.c.l.bf16 %v1291
        %v1305 = vunpack.c.l.bf16 %v1294
        %v1306 = vunpack.c.l.bf16 %v1297
        %1311 = vrot.lane.b32.xlu0 %v1303, 111
        %v1312 = vpop.permute.xlu0 %1311
        %1313 = vrot.lane.b32.xlu0 %v1304, 111
        %v1314 = vpop.permute.xlu0 %1313
        %1315 = vrot.lane.b32.xlu0 %v1305, 111
        %v1316 = vpop.permute.xlu0 %1315
        %1317 = vrot.lane.b32.xlu0 %v1306, 111
        %v1318 = vpop.permute.xlu0 %1317
        %v1319 = vsel %vm410, %v1312, %v1314
        %v1320 = vsel %vm410, %v1314, %v1316
        %v1321 = vsel %vm410, %v1316, %v1318
        %v1327 = vmul.f32 %v1298, %v1312
        %v1328 = vmul.f32 %v1299, %v1319
        %v1329 = vmul.f32 %v1300, %v1320
        %v1330 = vmul.f32 %v1301, %v1321
        %v1331 = vmul.f32 %v1302, %v1318
        %v1332 = vpack.c.bf16 %v1328, %v1327
        %v1333 = vpack.c.bf16 %v1330, %v1329
        %v1334 = vpack.c.bf16 %v1331, %v1331
        %1338 = vrot.lane.b32.xlu0 %v1332, 17
        %v1339 = vpop.permute.xlu0 %1338
        %1340 = vrot.lane.b32.xlu0 %v1333, 17
        %v1341 = vpop.permute.xlu0 %1340
        %1342 = vrot.lane.b32.xlu0 %v1334, 17
        %v1343 = vpop.permute.xlu0 %1342
        %v1344 = vrot.slane %v1339, 4
        %v1345 = vrot.slane %v1341, 4
        %v1346 = vrot.slane %v1343, 4
        %v1347 = vsel %vm453, %v1344, %v1345
        %v1348 = vsel %vm455, %v1339, %v1347
        %v1349 = vsel %vm453, %v1345, %v1346
        %v1350 = vsel %vm455, %v1341, %v1349
        %1353 = vst [vmem:[#allocation4] sm:$0xff] %v1348
        %1354 = vst [vmem:[#allocation4 + $0x8] sm:$0xff] %v1350
        %v1355 = vld [vmem:[#allocation3] sm:$0xff]
        %v1356 = vld [vmem:[#allocation3 + $0x8] sm:$0xff]
        %v1357 = vld [vmem:[#allocation3 + $0x10] sm:$0xf]
        %1358 = vst [vmem:[#allocation1] ss:$9 sm:$0xff] %v355
        %v1359 = vld [vmem:[#allocation1] sm:$0xff]
        %v1360 = vld [vmem:[#allocation1 + $0x9] sm:$0xff]
        %v1361 = vld [vmem:[#allocation1 + $0x12] sm:$0xff]
        %v1362 = vld [vmem:[#allocation1 + $0x1b] sm:$0xff]
        %v1363 = vpack.i.b16 %v1359, %v1359
        %v1365 = vperm.slane %v1363, 0
        %v1366 = vpack.i.b16 %v1360, %v1360
        %v1368 = vperm.slane %v1366, 0
        %v1369 = vpack.i.b16 %v1361, %v1361
        %v1371 = vperm.slane %v1369, 0
        %v1372 = vpack.i.b16 %v1362, %v1362
        %v1374 = vperm.slane %v1372, 0
        %v1375 = vunpack.c.l.bf16 %v1355
        %v1376 = vunpack.c.h.bf16 %v1355
        %v1377 = vunpack.c.l.bf16 %v1356
        %v1378 = vunpack.c.h.bf16 %v1356
        %v1379 = vunpack.c.l.bf16 %v1357
        %v1380 = vunpack.c.l.bf16 %v1365
        %v1381 = vunpack.c.l.bf16 %v1368
        %v1382 = vunpack.c.l.bf16 %v1371
        %v1383 = vunpack.c.l.bf16 %v1374
        %1388 = vrot.lane.b32.xlu0 %v1380, 112
        %v1389 = vpop.permute.xlu0 %1388
        %1390 = vrot.lane.b32.xlu0 %v1381, 112
        %v1391 = vpop.permute.xlu0 %1390
        %1392 = vrot.lane.b32.xlu0 %v1382, 112
        %v1393 = vpop.permute.xlu0 %1392
        %1394 = vrot.lane.b32.xlu0 %v1383, 112
        %v1395 = vpop.permute.xlu0 %1394
        %v1396 = vsel %vm504, %v1389, %v1391
        %v1397 = vsel %vm504, %v1391, %v1393
        %v1398 = vsel %vm504, %v1393, %v1395
        %v1404 = vmul.f32 %v1375, %v1389
        %v1405 = vmul.f32 %v1376, %v1396
        %v1406 = vmul.f32 %v1377, %v1397
        %v1407 = vmul.f32 %v1378, %v1398
        %v1408 = vmul.f32 %v1379, %v1395
        %v1409 = vpack.c.bf16 %v1405, %v1404
        %v1410 = vpack.c.bf16 %v1407, %v1406
        %v1411 = vpack.c.bf16 %v1408, %v1408
        %1415 = vrot.lane.b32.xlu0 %v1409, 16
        %v1416 = vpop.permute.xlu0 %1415
        %1417 = vrot.lane.b32.xlu0 %v1410, 16
        %v1418 = vpop.permute.xlu0 %1417
        %1419 = vrot.lane.b32.xlu0 %v1411, 16
        %v1420 = vpop.permute.xlu0 %1419
        %v1421 = vrot.slane %v1416, 4
        %v1422 = vrot.slane %v1418, 4
        %v1423 = vrot.slane %v1420, 4
        %v1424 = vsel %vm453, %v1421, %v1422
        %v1425 = vsel %vm551, %v1416, %v1424
        %v1426 = vsel %vm453, %v1422, %v1423
        %v1427 = vsel %vm551, %v1418, %v1426
        %1430 = vst [vmem:[#allocation4 + $0x10] sm:$0xff] %v1425
        %1431 = vst [vmem:[#allocation4 + $0x18] sm:$0xff] %v1427
        %v1432 = vld [vmem:[#allocation3] sm:$0xff]
        %v1433 = vld [vmem:[#allocation3 + $0x8] sm:$0xff]
        %v1434 = vld [vmem:[#allocation3 + $0x10] sm:$0xf]
        %1435 = vst [vmem:[#allocation1] ss:$9 sm:$0xff] %v357
        %v1436 = vld [vmem:[#allocation1] sm:$0xff]
        %v1437 = vld [vmem:[#allocation1 + $0x9] sm:$0xff]
        %v1438 = vld [vmem:[#allocation1 + $0x12] sm:$0xff]
        %v1439 = vld [vmem:[#allocation1 + $0x1b] sm:$0xff]
        %v1440 = vpack.i.b16 %v1436, %v1436
        %v1442 = vperm.slane %v1440, 0
        %v1443 = vpack.i.b16 %v1437, %v1437
        %v1445 = vperm.slane %v1443, 0
        %v1446 = vpack.i.b16 %v1438, %v1438
        %v1448 = vperm.slane %v1446, 0
        %v1449 = vpack.i.b16 %v1439, %v1439
        %v1451 = vperm.slane %v1449, 0
        %v1452 = vunpack.c.l.bf16 %v1432
        %v1453 = vunpack.c.h.bf16 %v1432
        %v1454 = vunpack.c.l.bf16 %v1433
        %v1455 = vunpack.c.h.bf16 %v1433
        %v1456 = vunpack.c.l.bf16 %v1434
        %v1457 = vunpack.c.l.bf16 %v1442
        %v1458 = vunpack.c.l.bf16 %v1445
        %v1459 = vunpack.c.l.bf16 %v1448
        %v1460 = vunpack.c.l.bf16 %v1451
        %1465 = vrot.lane.b32.xlu0 %v1457, 113
        %v1466 = vpop.permute.xlu0 %1465
        %1467 = vrot.lane.b32.xlu0 %v1458, 113
        %v1468 = vpop.permute.xlu0 %1467
        %1469 = vrot.lane.b32.xlu0 %v1459, 113
        %v1470 = vpop.permute.xlu0 %1469
        %1471 = vrot.lane.b32.xlu0 %v1460, 113
        %v1472 = vpop.permute.xlu0 %1471
        %v1473 = vsel %vm600, %v1466, %v1468
        %v1474 = vsel %vm600, %v1468, %v1470
        %v1475 = vsel %vm600, %v1470, %v1472
        %v1481 = vmul.f32 %v1452, %v1466
        %v1482 = vmul.f32 %v1453, %v1473
        %v1483 = vmul.f32 %v1454, %v1474
        %v1484 = vmul.f32 %v1455, %v1475
        %v1485 = vmul.f32 %v1456, %v1472
        %v1486 = vpack.c.bf16 %v1482, %v1481
        %v1487 = vpack.c.bf16 %v1484, %v1483
        %v1488 = vpack.c.bf16 %v1485, %v1485
        %1492 = vrot.lane.b32.xlu0 %v1486, 15
        %v1493 = vpop.permute.xlu0 %1492
        %1494 = vrot.lane.b32.xlu0 %v1487, 15
        %v1495 = vpop.permute.xlu0 %1494
        %1496 = vrot.lane.b32.xlu0 %v1488, 15
        %v1497 = vpop.permute.xlu0 %1496
        %v1498 = vrot.slane %v1493, 4
        %v1499 = vrot.slane %v1495, 4
        %v1500 = vrot.slane %v1497, 4
        %v1501 = vsel %vm453, %v1498, %v1499
        %v1502 = vsel %vm644, %v1493, %v1501
        %v1503 = vsel %vm453, %v1499, %v1500
        %v1504 = vsel %vm644, %v1495, %v1503
        %1507 = vst [vmem:[#allocation4 + $0x20] sm:$0xff] %v1502
        %1508 = vst [vmem:[#allocation4 + $0x28] sm:$0xff] %v1504
        %v1509 = vld [vmem:[#allocation3] sm:$0xff]
        %v1510 = vld [vmem:[#allocation3 + $0x8] sm:$0xff]
        %v1511 = vld [vmem:[#allocation3 + $0x10] sm:$0xf]
        %1512 = vst [vmem:[#allocation1] ss:$9 sm:$0xff] %v359
        %v1513 = vld [vmem:[#allocation1] sm:$0xff]
        %v1514 = vld [vmem:[#allocation1 + $0x9] sm:$0xff]
        %v1515 = vld [vmem:[#allocation1 + $0x12] sm:$0xff]
        %v1516 = vld [vmem:[#allocation1 + $0x1b] sm:$0xff]
        %v1517 = vpack.i.b16 %v1513, %v1513
        %v1519 = vperm.slane %v1517, 0
        %v1520 = vpack.i.b16 %v1514, %v1514
        %v1522 = vperm.slane %v1520, 0
        %v1523 = vpack.i.b16 %v1515, %v1515
        %v1525 = vperm.slane %v1523, 0
        %v1526 = vpack.i.b16 %v1516, %v1516
        %v1528 = vperm.slane %v1526, 0
        %v1529 = vunpack.c.l.bf16 %v1509
        %v1530 = vunpack.c.h.bf16 %v1509
        %v1531 = vunpack.c.l.bf16 %v1510
        %v1532 = vunpack.c.h.bf16 %v1510
        %v1533 = vunpack.c.l.bf16 %v1511
        %v1534 = vunpack.c.l.bf16 %v1519
        %v1535 = vunpack.c.l.bf16 %v1522
        %v1536 = vunpack.c.l.bf16 %v1525
        %v1537 = vunpack.c.l.bf16 %v1528
        %1542 = vrot.lane.b32.xlu0 %v1534, 127
        %v1543 = vpop.permute.xlu0 %1542
        %1544 = vrot.lane.b32.xlu0 %v1535, 127
        %v1545 = vpop.permute.xlu0 %1544
        %1546 = vrot.lane.b32.xlu0 %v1536, 127
        %v1547 = vpop.permute.xlu0 %1546
        %1548 = vrot.lane.b32.xlu0 %v1537, 127
        %v1549 = vpop.permute.xlu0 %1548
        %v1550 = vsel %vm693, %v1543, %v1545
        %v1551 = vsel %vm693, %v1545, %v1547
        %v1552 = vsel %vm693, %v1547, %v1549
        %v1558 = vmul.f32 %v1529, %v1543
        %v1559 = vmul.f32 %v1530, %v1550
        %v1560 = vmul.f32 %v1531, %v1551
        %v1561 = vmul.f32 %v1532, %v1552
        %v1562 = vmul.f32 %v1533, %v1549
        %v1563 = vpack.c.bf16 %v1559, %v1558
        %v1564 = vpack.c.bf16 %v1561, %v1560
        %v1565 = vpack.c.bf16 %v1562, %v1562
        %1569 = vrot.lane.b32.xlu0 %v1563, 1
        %v1570 = vpop.permute.xlu0 %1569
        %1571 = vrot.lane.b32.xlu0 %v1564, 1
        %v1572 = vpop.permute.xlu0 %1571
        %1573 = vrot.lane.b32.xlu0 %v1565, 1
        %v1574 = vpop.permute.xlu0 %1573
        %v1575 = vrot.slane %v1570, 4
        %v1576 = vrot.slane %v1572, 4
        %v1577 = vrot.slane %v1574, 4
        %v1578 = vsel %vm453, %v1575, %v1576
        %v1579 = vsel %vm740, %v1570, %v1578
        %v1580 = vsel %vm453, %v1576, %v1577
        %v1581 = vsel %vm740, %v1572, %v1580
        %1584 = vst [vmem:[#allocation4 + $0x30] sm:$0xff] %v1579
        %1585 = vst [vmem:[#allocation4 + $0x38] sm:$0xff] %v1581
        %v1586 = vld [vmem:[#allocation3 + $0x4] sm:$0xff]
        %v1587 = vld [vmem:[#allocation3 + $0xc] sm:$0xff]
        %1588 = vst [vmem:[#allocation4 + $0x40] sm:$0xff] %v1586
        %1589 = vst [vmem:[#allocation4 + $0x48] sm:$0xff] %v1587
        %v1590 = vld [vmem:[#allocation3 + $0x4] sm:$0xff]
        %v1591 = vld [vmem:[#allocation3 + $0xc] sm:$0xff]
        %v1592 = vld [vmem:[#allocation3 + $0x14] sm:$0xf]
        %1593 = vst [vmem:[#allocation1] ss:$9 sm:$0xff] %v361
        %v1594 = vld [vmem:[#allocation1] sm:$0xff]
        %v1595 = vld [vmem:[#allocation1 + $0x9] sm:$0xff]
        %v1596 = vld [vmem:[#allocation1 + $0x12] sm:$0xff]
        %v1597 = vld [vmem:[#allocation1 + $0x1b] sm:$0xff]
        %v1598 = vpack.i.b16 %v1594, %v1594
        %v1600 = vperm.slane %v1598, 0
        %v1601 = vpack.i.b16 %v1595, %v1595
        %v1603 = vperm.slane %v1601, 0
        %v1604 = vpack.i.b16 %v1596, %v1596
        %v1606 = vperm.slane %v1604, 0
        %v1607 = vpack.i.b16 %v1597, %v1597
        %v1609 = vperm.slane %v1607, 0
        %v1610 = vunpack.c.l.bf16 %v1590
        %v1611 = vunpack.c.h.bf16 %v1590
        %v1612 = vunpack.c.l.bf16 %v1591
        %v1613 = vunpack.c.h.bf16 %v1591
        %v1614 = vunpack.c.l.bf16 %v1592
        %v1615 = vunpack.c.l.bf16 %v1600
        %v1616 = vunpack.c.l.bf16 %v1603
        %v1617 = vunpack.c.l.bf16 %v1606
        %v1618 = vunpack.c.l.bf16 %v1609
        %1623 = vrot.lane.b32.xlu0 %v1615, 1
        %v1624 = vpop.permute.xlu0 %1623
        %1625 = vrot.lane.b32.xlu0 %v1616, 1
        %v1626 = vpop.permute.xlu0 %1625
        %1627 = vrot.lane.b32.xlu0 %v1617, 1
        %v1628 = vpop.permute.xlu0 %1627
        %1629 = vrot.lane.b32.xlu0 %v1618, 1
        %v1630 = vpop.permute.xlu0 %1629
        %v1631 = vsel %vm798, %v1624, %v1626
        %v1632 = vsel %vm798, %v1626, %v1628
        %v1633 = vsel %vm798, %v1628, %v1630
        %v1639 = vmul.f32 %v1610, %v1624
        %v1640 = vmul.f32 %v1611, %v1631
        %v1641 = vmul.f32 %v1612, %v1632
        %v1642 = vmul.f32 %v1613, %v1633
        %v1643 = vmul.f32 %v1614, %v1630
        %v1644 = vpack.c.bf16 %v1640, %v1639
        %v1645 = vpack.c.bf16 %v1642, %v1641
        %v1646 = vpack.c.bf16 %v1643, %v1643
        %1650 = vrot.lane.b32.xlu0 %v1644, 127
        %v1651 = vpop.permute.xlu0 %1650
        %1652 = vrot.lane.b32.xlu0 %v1645, 127
        %v1653 = vpop.permute.xlu0 %1652
        %1654 = vrot.lane.b32.xlu0 %v1646, 127
        %v1655 = vpop.permute.xlu0 %1654
        %v1656 = vrot.slane %v1651, 4
        %v1657 = vrot.slane %v1653, 4
        %v1658 = vrot.slane %v1655, 4
        %v1659 = vsel %vm453, %v1656, %v1657
        %v1660 = vsel %vm845, %v1651, %v1659
        %v1661 = vsel %vm453, %v1657, %v1658
        %v1662 = vsel %vm845, %v1653, %v1661
        %1665 = vst [vmem:[#allocation4 + $0x50] sm:$0xff] %v1660
        %1666 = vst [vmem:[#allocation4 + $0x58] sm:$0xff] %v1662
        %v1667 = vld [vmem:[#allocation3 + $0x4] sm:$0xff]
        %v1668 = vld [vmem:[#allocation3 + $0xc] sm:$0xff]
        %v1669 = vld [vmem:[#allocation3 + $0x14] sm:$0xf]
        %1670 = vst [vmem:[#allocation1] ss:$9 sm:$0xff] %v363
        %v1671 = vld [vmem:[#allocation1] sm:$0xff]
        %v1672 = vld [vmem:[#allocation1 + $0x9] sm:$0xff]
        %v1673 = vld [vmem:[#allocation1 + $0x12] sm:$0xff]
        %v1674 = vld [vmem:[#allocation1 + $0x1b] sm:$0xff]
        %v1675 = vpack.i.b16 %v1671, %v1671
        %v1677 = vperm.slane %v1675, 0
        %v1678 = vpack.i.b16 %v1672, %v1672
        %v1680 = vperm.slane %v1678, 0
        %v1681 = vpack.i.b16 %v1673, %v1673
        %v1683 = vperm.slane %v1681, 0
        %v1684 = vpack.i.b16 %v1674, %v1674
        %v1686 = vperm.slane %v1684, 0
        %v1687 = vunpack.c.l.bf16 %v1667
        %v1688 = vunpack.c.h.bf16 %v1667
        %v1689 = vunpack.c.l.bf16 %v1668
        %v1690 = vunpack.c.h.bf16 %v1668
        %v1691 = vunpack.c.l.bf16 %v1669
        %v1692 = vunpack.c.l.bf16 %v1677
        %v1693 = vunpack.c.l.bf16 %v1680
        %v1694 = vunpack.c.l.bf16 %v1683
        %v1695 = vunpack.c.l.bf16 %v1686
        %1700 = vrot.lane.b32.xlu0 %v1692, 15
        %v1701 = vpop.permute.xlu0 %1700
        %1702 = vrot.lane.b32.xlu0 %v1693, 15
        %v1703 = vpop.permute.xlu0 %1702
        %1704 = vrot.lane.b32.xlu0 %v1694, 15
        %v1705 = vpop.permute.xlu0 %1704
        %1706 = vrot.lane.b32.xlu0 %v1695, 15
        %v1707 = vpop.permute.xlu0 %1706
        %v1708 = vsel %vm894, %v1701, %v1703
        %v1709 = vsel %vm894, %v1703, %v1705
        %v1710 = vsel %vm894, %v1705, %v1707
        %v1716 = vmul.f32 %v1687, %v1701
        %v1717 = vmul.f32 %v1688, %v1708
        %v1718 = vmul.f32 %v1689, %v1709
        %v1719 = vmul.f32 %v1690, %v1710
        %v1720 = vmul.f32 %v1691, %v1707
        %v1721 = vpack.c.bf16 %v1717, %v1716
        %v1722 = vpack.c.bf16 %v1719, %v1718
        %v1723 = vpack.c.bf16 %v1720, %v1720
        %1727 = vrot.lane.b32.xlu0 %v1721, 113
        %v1728 = vpop.permute.xlu0 %1727
        %1729 = vrot.lane.b32.xlu0 %v1722, 113
        %v1730 = vpop.permute.xlu0 %1729
        %1731 = vrot.lane.b32.xlu0 %v1723, 113
        %v1732 = vpop.permute.xlu0 %1731
        %v1733 = vrot.slane %v1728, 4
        %v1734 = vrot.slane %v1730, 4
        %v1735 = vrot.slane %v1732, 4
        %v1736 = vsel %vm453, %v1733, %v1734
        %v1737 = vsel %vm938, %v1728, %v1736
        %v1738 = vsel %vm453, %v1734, %v1735
        %v1739 = vsel %vm938, %v1730, %v1738
        %1742 = vst [vmem:[#allocation4 + $0x60] sm:$0xff] %v1737
        %1743 = vst [vmem:[#allocation4 + $0x68] sm:$0xff] %v1739
        %v1744 = vld [vmem:[#allocation3 + $0x4] sm:$0xff]
        %v1745 = vld [vmem:[#allocation3 + $0xc] sm:$0xff]
        %v1746 = vld [vmem:[#allocation3 + $0x14] sm:$0xf]
        %1747 = vst [vmem:[#allocation1] ss:$9 sm:$0xff] %v365
        %v1748 = vld [vmem:[#allocation1] sm:$0xff]
        %v1749 = vld [vmem:[#allocation1 + $0x9] sm:$0xff]
        %v1750 = vld [vmem:[#allocation1 + $0x12] sm:$0xff]
        %v1751 = vld [vmem:[#allocation1 + $0x1b] sm:$0xff]
        %v1752 = vpack.i.b16 %v1748, %v1748
        %v1754 = vperm.slane %v1752, 0
        %v1755 = vpack.i.b16 %v1749, %v1749
        %v1757 = vperm.slane %v1755, 0
        %v1758 = vpack.i.b16 %v1750, %v1750
        %v1760 = vperm.slane %v1758, 0
        %v1761 = vpack.i.b16 %v1751, %v1751
        %v1763 = vperm.slane %v1761, 0
        %v1764 = vunpack.c.l.bf16 %v1744
        %v1765 = vunpack.c.h.bf16 %v1744
        %v1766 = vunpack.c.l.bf16 %v1745
        %v1767 = vunpack.c.h.bf16 %v1745
        %v1768 = vunpack.c.l.bf16 %v1746
        %v1769 = vunpack.c.l.bf16 %v1754
        %v1770 = vunpack.c.l.bf16 %v1757
        %v1771 = vunpack.c.l.bf16 %v1760
        %v1772 = vunpack.c.l.bf16 %v1763
        %1777 = vrot.lane.b32.xlu0 %v1769, 16
        %v1778 = vpop.permute.xlu0 %1777
        %1779 = vrot.lane.b32.xlu0 %v1770, 16
        %v1780 = vpop.permute.xlu0 %1779
        %1781 = vrot.lane.b32.xlu0 %v1771, 16
        %v1782 = vpop.permute.xlu0 %1781
        %1783 = vrot.lane.b32.xlu0 %v1772, 16
        %v1784 = vpop.permute.xlu0 %1783
        %v1785 = vsel %vm987, %v1778, %v1780
        %v1786 = vsel %vm987, %v1780, %v1782
        %v1787 = vsel %vm987, %v1782, %v1784
        %v1793 = vmul.f32 %v1764, %v1778
        %v1794 = vmul.f32 %v1765, %v1785
        %v1795 = vmul.f32 %v1766, %v1786
        %v1796 = vmul.f32 %v1767, %v1787
        %v1797 = vmul.f32 %v1768, %v1784
        %v1798 = vpack.c.bf16 %v1794, %v1793
        %v1799 = vpack.c.bf16 %v1796, %v1795
        %v1800 = vpack.c.bf16 %v1797, %v1797
        %1804 = vrot.lane.b32.xlu0 %v1798, 112
        %v1805 = vpop.permute.xlu0 %1804
        %1806 = vrot.lane.b32.xlu0 %v1799, 112
        %v1807 = vpop.permute.xlu0 %1806
        %1808 = vrot.lane.b32.xlu0 %v1800, 112
        %v1809 = vpop.permute.xlu0 %1808
        %v1810 = vrot.slane %v1805, 4
        %v1811 = vrot.slane %v1807, 4
        %v1812 = vrot.slane %v1809, 4
        %v1813 = vsel %vm453, %v1810, %v1811
        %v1814 = vsel %vm1034, %v1805, %v1813
        %v1815 = vsel %vm453, %v1811, %v1812
        %v1816 = vsel %vm1034, %v1807, %v1815
        %1819 = vst [vmem:[#allocation4 + $0x70] sm:$0xff] %v1814
        %1820 = vst [vmem:[#allocation4 + $0x78] sm:$0xff] %v1816
        %v1821 = vld [vmem:[#allocation3 + $0x4] sm:$0xff]
        %v1822 = vld [vmem:[#allocation3 + $0xc] sm:$0xff]
        %v1823 = vld [vmem:[#allocation3 + $0x14] sm:$0xf]
        %1824 = vst [vmem:[#allocation1] ss:$9 sm:$0xff] %v367
        %v1825 = vld [vmem:[#allocation1] sm:$0xff]
        %v1826 = vld [vmem:[#allocation1 + $0x9] sm:$0xff]
        %v1827 = vld [vmem:[#allocation1 + $0x12] sm:$0xff]
        %v1828 = vld [vmem:[#allocation1 + $0x1b] sm:$0xff]
        %v1829 = vpack.i.b16 %v1825, %v1825
        %v1831 = vperm.slane %v1829, 0
        %v1832 = vpack.i.b16 %v1826, %v1826
        %v1834 = vperm.slane %v1832, 0
        %v1835 = vpack.i.b16 %v1827, %v1827
        %v1837 = vperm.slane %v1835, 0
        %v1838 = vpack.i.b16 %v1828, %v1828
        %v1840 = vperm.slane %v1838, 0
        %v1841 = vunpack.c.l.bf16 %v1821
        %v1842 = vunpack.c.h.bf16 %v1821
        %v1843 = vunpack.c.l.bf16 %v1822
        %v1844 = vunpack.c.h.bf16 %v1822
        %v1845 = vunpack.c.l.bf16 %v1823
        %v1846 = vunpack.c.l.bf16 %v1831
        %v1847 = vunpack.c.l.bf16 %v1834
        %v1848 = vunpack.c.l.bf16 %v1837
        %v1849 = vunpack.c.l.bf16 %v1840
        %1854 = vrot.lane.b32.xlu0 %v1846, 17
        %v1855 = vpop.permute.xlu0 %1854
        %1856 = vrot.lane.b32.xlu0 %v1847, 17
        %v1857 = vpop.permute.xlu0 %1856
        %1858 = vrot.lane.b32.xlu0 %v1848, 17
        %v1859 = vpop.permute.xlu0 %1858
        %1860 = vrot.lane.b32.xlu0 %v1849, 17
        %v1861 = vpop.permute.xlu0 %1860
        %v1862 = vsel %vm1083, %v1855, %v1857
        %v1863 = vsel %vm1083, %v1857, %v1859
        %v1864 = vsel %vm1083, %v1859, %v1861
        %v1870 = vmul.f32 %v1841, %v1855
        %v1871 = vmul.f32 %v1842, %v1862
        %v1872 = vmul.f32 %v1843, %v1863
        %v1873 = vmul.f32 %v1844, %v1864
        %v1874 = vmul.f32 %v1845, %v1861
        %v1875 = vpack.c.bf16 %v1871, %v1870
        %v1876 = vpack.c.bf16 %v1873, %v1872
        %v1877 = vpack.c.bf16 %v1874, %v1874
        %1881 = vrot.lane.b32.xlu0 %v1875, 111
        %v1882 = vpop.permute.xlu0 %1881
        %1883 = vrot.lane.b32.xlu0 %v1876, 111
        %v1884 = vpop.permute.xlu0 %1883
        %1885 = vrot.lane.b32.xlu0 %v1877, 111
        %v1886 = vpop.permute.xlu0 %1885
        %v1887 = vrot.slane %v1882, 4
        %v1888 = vrot.slane %v1884, 4
        %v1889 = vrot.slane %v1886, 4
        %v1890 = vsel %vm453, %v1887, %v1888
        %v1891 = vsel %vm1127, %v1882, %v1890
        %v1892 = vsel %vm453, %v1888, %v1889
        %v1893 = vsel %vm1127, %v1884, %v1892
        %1896 = vst [vmem:[#allocation4 + $0x80] sm:$0xff] %v1891
        %1897 = vst [vmem:[#allocation4 + $0x88] sm:$0xff] %v1893
        %v1898 = vld [vmem:[%s3] sm:$0xf]
        %v1899 = vld [vmem:[#allocation4] sm:$0xff]
        %v1900 = vld [vmem:[#allocation4 + $0x8] sm:$0xff]
        %v1901 = vld [vmem:[#allocation4 + $0x10] sm:$0xff]
        %v1902 = vld [vmem:[#allocation4 + $0x18] sm:$0xff]
        %v1903 = vld [vmem:[#allocation4 + $0x20] sm:$0xff]
        %v1904 = vld [vmem:[#allocation4 + $0x28] sm:$0xff]
        %v1905 = vld [vmem:[#allocation4 + $0x30] sm:$0xff]
        %v1906 = vld [vmem:[#allocation4 + $0x38] sm:$0xff]
        %v1907 = vld [vmem:[#allocation4 + $0x40] sm:$0xff]
        %v1908 = vld [vmem:[#allocation4 + $0x48] sm:$0xff]
        %v1909 = vld [vmem:[#allocation4 + $0x50] sm:$0xff]
        %v1910 = vld [vmem:[#allocation4 + $0x58] sm:$0xff]
        %v1911 = vld [vmem:[#allocation4 + $0x60] sm:$0xff]
        %v1912 = vld [vmem:[#allocation4 + $0x68] sm:$0xff]
        %v1913 = vld [vmem:[#allocation4 + $0x70] sm:$0xff]
        %v1914 = vld [vmem:[#allocation4 + $0x78] sm:$0xff]
        %v1915 = vld [vmem:[#allocation4 + $0x80] sm:$0xff]
        %v1916 = vld [vmem:[#allocation4 + $0x88] sm:$0xff]
        %v1917 = vld [vmem:[#allocation4 + $0x90] sm:$0xff]
        %v1918 = vld [vmem:[#allocation4 + $0x98] sm:$0xff]
        %v1919 = vld [vmem:[%s4] sm:$0xff]
        %1921 = vset.pattern.permute.xlu0 0
        %1922 = vperm.xlu0 %1921, %v1919
        %v1923 = vpop.permute.xlu0 %1922
        %v1945 = vunpack.c.l.b16 %v1899
        %v1946 = vunpack.c.h.b16 %v1899
        %v1947 = vunpack.c.l.b16 %v1900
        %v1948 = vunpack.c.h.b16 %v1900
        %v1949 = vunpack.c.l.b16 %v1901
        %v1950 = vunpack.c.h.b16 %v1901
        %v1951 = vunpack.c.l.b16 %v1902
        %v1952 = vunpack.c.h.b16 %v1902
        %v1953 = vunpack.c.l.b16 %v1903
        %v1954 = vunpack.c.h.b16 %v1903
        %v1955 = vunpack.c.l.b16 %v1904
        %v1956 = vunpack.c.h.b16 %v1904
        %v1957 = vunpack.c.l.b16 %v1905
        %v1958 = vunpack.c.h.b16 %v1905
        %v1959 = vunpack.c.l.b16 %v1906
        %v1960 = vunpack.c.h.b16 %v1906
        %v1961 = vunpack.c.l.b16 %v1907
        %v1962 = vunpack.c.h.b16 %v1907
        %v1963 = vunpack.c.l.b16 %v1908
        %v1964 = vunpack.c.h.b16 %v1908
        %v1965 = vunpack.c.l.b16 %v1909
        %v1966 = vunpack.c.h.b16 %v1909
        %v1967 = vunpack.c.l.b16 %v1910
        %v1968 = vunpack.c.h.b16 %v1910
        %v1969 = vunpack.c.l.b16 %v1911
        %v1970 = vunpack.c.h.b16 %v1911
        %v1971 = vunpack.c.l.b16 %v1912
        %v1972 = vunpack.c.h.b16 %v1912
        %v1973 = vunpack.c.l.b16 %v1913
        %v1974 = vunpack.c.h.b16 %v1913
        %v1975 = vunpack.c.l.b16 %v1914
        %v1976 = vunpack.c.h.b16 %v1914
        %v1977 = vunpack.c.l.b16 %v1915
        %v1978 = vunpack.c.h.b16 %v1915
        %v1979 = vunpack.c.l.b16 %v1916
        %v1980 = vunpack.c.h.b16 %v1916
        %v1981 = vunpack.c.l.b16 %v1917
        %v1982 = vunpack.c.h.b16 %v1917
        %v1983 = vunpack.c.l.b16 %v1918
        %v1984 = vunpack.c.h.b16 %v1918
        %v1985 = vpack.c.b16 %v1949, %v1945
        %v1986 = vpack.c.b16 %v1950, %v1946
        %v1987 = vpack.c.b16 %v1951, %v1947
        %v1988 = vpack.c.b16 %v1952, %v1948
        %v1989 = vpack.c.b16 %v1957, %v1953
        %v1990 = vpack.c.b16 %v1958, %v1954
        %v1991 = vpack.c.b16 %v1959, %v1955
        %v1992 = vpack.c.b16 %v1960, %v1956
        %v1993 = vpack.c.b16 %v1965, %v1961
        %v1994 = vpack.c.b16 %v1966, %v1962
        %v1995 = vpack.c.b16 %v1967, %v1963
        %v1996 = vpack.c.b16 %v1968, %v1964
        %v1997 = vpack.c.b16 %v1973, %v1969
        %v1998 = vpack.c.b16 %v1974, %v1970
        %v1999 = vpack.c.b16 %v1975, %v1971
        %v2000 = vpack.c.b16 %v1976, %v1972
        %v2001 = vpack.c.b16 %v1981, %v1977
        %v2002 = vpack.c.b16 %v1982, %v1978
        %v2003 = vpack.c.b16 %v1983, %v1979
        %v2004 = vpack.c.b16 %v1984, %v1980
        %vm2025 = vcmask 654336
        %v2027 = vsel %vm2025, %v1898, 0
        %2029 = vmatpush.bf16.msra.mxu0 0
        %2030 = vmatpush.bf16.msra.mxu0 0
        %2031 = vmatpush.bf16.msra.mxu0 0
        %2032 = vmatpush.bf16.msra.mxu0 %v2001
        %2033 = vmatpush.bf16.msra.mxu0 %v1997
        %2034 = vmatpush.bf16.msra.mxu0 %v1993
        %2035 = vmatpush.bf16.msra.mxu0 %v1989
        %2036 = vmatpush.bf16.msra.mxu0 %v1985
        %2037 = vmatmul.bf16.gmra.mxu0 %v2027
        %v2038 = vpop.f32.mrf.mxu0
        %v2039 = vadd.f32 %v1923, %v2038
        %v2040 = vpop.f32.mrf.mxu0
        %2041 = vdwg.mxu0
        %2042 = vmatpush.bf16.msra.mxu0 0
        %2043 = vmatpush.bf16.msra.mxu0 0
        %2044 = vmatpush.bf16.msra.mxu0 0
        %2045 = vmatpush.bf16.msra.mxu0 %v2002
        %2046 = vmatpush.bf16.msra.mxu0 %v1998
        %2047 = vmatpush.bf16.msra.mxu0 %v1994
        %2048 = vmatpush.bf16.msra.mxu0 %v1990
        %2049 = vmatpush.bf16.msra.mxu0 %v1986
        %2050 = vmatmul.bf16.gmra.mxu0 %v2027
        %v2051 = vpop.f32.mrf.mxu0
        %v2052 = vadd.f32 %v1923, %v2051
        %v2053 = vpop.f32.mrf.mxu0
        %2054 = vdwg.mxu0
        %2055 = vmatpush.bf16.msra.mxu0 0
        %2056 = vmatpush.bf16.msra.mxu0 0
        %2057 = vmatpush.bf16.msra.mxu0 0
        %2058 = vmatpush.bf16.msra.mxu0 %v2003
        %2059 = vmatpush.bf16.msra.mxu0 %v1999
        %2060 = vmatpush.bf16.msra.mxu0 %v1995
        %2061 = vmatpush.bf16.msra.mxu0 %v1991
        %2062 = vmatpush.bf16.msra.mxu0 %v1987
        %2063 = vmatmul.bf16.gmra.mxu0 %v2027
        %v2064 = vpop.f32.mrf.mxu0
        %v2065 = vadd.f32 %v1923, %v2064
        %v2066 = vpop.f32.mrf.mxu0
        %2067 = vdwg.mxu0
        %2068 = vmatpush.bf16.msra.mxu0 0
        %2069 = vmatpush.bf16.msra.mxu0 0
        %2070 = vmatpush.bf16.msra.mxu0 0
        %2071 = vmatpush.bf16.msra.mxu0 %v2004
        %2072 = vmatpush.bf16.msra.mxu0 %v2000
        %2073 = vmatpush.bf16.msra.mxu0 %v1996
        %2074 = vmatpush.bf16.msra.mxu0 %v1992
        %2075 = vmatpush.bf16.msra.mxu0 %v1988
        %2076 = vmatmul.bf16.gmra.mxu0 %v2027
        %v2077 = vpop.f32.mrf.mxu0
        %v2078 = vadd.f32 %v1923, %v2077
        %v2079 = vpop.f32.mrf.mxu0
        %2080 = vdwg.mxu0
        %v2081 = vld [vmem:[#allocation2 + $0x2] sm:$0xff]
        %v2082 = vld [vmem:[%s6] sm:$0xf]
        %2084 = vst [vmem:[#allocation1] ss:$4 sm:$0xff] %v2081
        %v2085 = vld.sshfl [vmem:[#allocation1] sm:$0xff pattern:$0x73625140]
        %v2086 = vld.sshfl [vmem:[#allocation1 + $0x8] sm:$0xff pattern:$0x73625140]
        %v2087 = vld.sshfl [vmem:[#allocation1 + $0x10] sm:$0xff pattern:$0x73625140]
        %v2088 = vld.sshfl [vmem:[#allocation1 + $0x18] sm:$0xff pattern:$0x73625140]
        %vm2089 = vcmask 31744
        %v2091 = vsel %vm2089, %v2082, 0
        %v2093 = vsel %vm331, %v2085, 0
        %v2095 = vsel %vm331, %v2086, 0
        %v2097 = vsel %vm331, %v2087, 0
        %v2099 = vsel %vm331, %v2088, 0
        %2101 = vmatpush.bf16.msra.mxu0 0
        %2102 = vmatpush.bf16.msra.mxu0 0
        %2103 = vmatpush.bf16.msra.mxu0 0
        %2104 = vmatpush.bf16.msra.mxu0 0
        %2105 = vmatpush.bf16.msra.mxu0 0
        %2106 = vmatpush.bf16.msra.mxu0 0
        %2107 = vmatpush.bf16.msra.mxu0 0
        %2108 = vmatpush.bf16.msra.mxu0 %v2093
        %2109 = vmatmul.bf16.gmra.mxu0 %v2091
        %v2110 = vpop.f32.mrf.mxu0
        %v2111 = vadd.f32 0.0, %v2110
        %v2112 = vpop.f32.mrf.mxu0
        %2113 = vdwg.mxu0
        %2114 = vmatpush.bf16.msra.mxu0 0
        %2115 = vmatpush.bf16.msra.mxu0 0
        %2116 = vmatpush.bf16.msra.mxu0 0
        %2117 = vmatpush.bf16.msra.mxu0 0
        %2118 = vmatpush.bf16.msra.mxu0 0
        %2119 = vmatpush.bf16.msra.mxu0 0
        %2120 = vmatpush.bf16.msra.mxu0 0
        %2121 = vmatpush.bf16.msra.mxu0 %v2095
        %2122 = vmatmul.bf16.gmra.mxu0 %v2091
        %v2123 = vpop.f32.mrf.mxu0
        %v2124 = vadd.f32 0.0, %v2123
        %v2125 = vpop.f32.mrf.mxu0
        %2126 = vdwg.mxu0
        %2127 = vmatpush.bf16.msra.mxu0 0
        %2128 = vmatpush.bf16.msra.mxu0 0
        %2129 = vmatpush.bf16.msra.mxu0 0
        %2130 = vmatpush.bf16.msra.mxu0 0
        %2131 = vmatpush.bf16.msra.mxu0 0
        %2132 = vmatpush.bf16.msra.mxu0 0
        %2133 = vmatpush.bf16.msra.mxu0 0
        %2134 = vmatpush.bf16.msra.mxu0 %v2097
        %2135 = vmatmul.bf16.gmra.mxu0 %v2091
        %v2136 = vpop.f32.mrf.mxu0
        %v2137 = vadd.f32 0.0, %v2136
        %v2138 = vpop.f32.mrf.mxu0
        %2139 = vdwg.mxu0
        %2140 = vmatpush.bf16.msra.mxu0 0
        %2141 = vmatpush.bf16.msra.mxu0 0
        %2142 = vmatpush.bf16.msra.mxu0 0
        %2143 = vmatpush.bf16.msra.mxu0 0
        %2144 = vmatpush.bf16.msra.mxu0 0
        %2145 = vmatpush.bf16.msra.mxu0 0
        %2146 = vmatpush.bf16.msra.mxu0 0
        %2147 = vmatpush.bf16.msra.mxu0 %v2099
        %2148 = vmatmul.bf16.gmra.mxu0 %v2091
        %v2149 = vpop.f32.mrf.mxu0
        %v2150 = vadd.f32 0.0, %v2149
        %v2151 = vpop.f32.mrf.mxu0
        %2152 = vdwg.mxu0
        %v2153 = vadd.f32 %v2039, %v2111
        %v2154 = vadd.f32 %v2052, %v2124
        %v2155 = vadd.f32 %v2065, %v2137
        %v2156 = vadd.f32 %v2078, %v2150
        %v2157 = vld [vmem:[%s7] sm:$0xff]
        %2159 = vset.pattern.permute.xlu0 0
        %2160 = vperm.xlu0 %2159, %v2157
        %v2161 = vpop.permute.xlu0 %2160
        %v2163 = vadd.f32 %v2153, %v2161
        %v2164 = vadd.f32 %v2154, %v2161
        %v2165 = vadd.f32 %v2155, %v2161
        %v2166 = vadd.f32 %v2156, %v2161
        %v2167 = vmax.f32 %v2163, 0.0
        %v2168 = vmax.f32 %v2164, 0.0
        %2169 = vst [vmem:[%s301] sm:$0xff] %v2167
        %2170 = vst [vmem:[%s301 + $0x8] sm:$0xff] %v2168
        %v2171 = vmax.f32 %v2165, 0.0
        %v2172 = vmax.f32 %v2166, 0.0
        %s2173 = scalar_lea.vmem %s301, 16 [#allocation5]
        %2174 = vst [vmem:[%s2173] sm:$0xff] %v2171
        %2175 = vst [vmem:[%s2173 + $0x8] sm:$0xff] %v2172
        %s2176 = sand.u32 %s203, 1
        %s2177 = scalar_lea.sflag [#allocation6], %s2176
        %s2178 = sand.u32 %s203, 1
        %s2179 = smul.addr %s2178, 32
        %s2180 = scalar_lea.vmem [#allocation5], %s2179
        // Predicated region
        $region53: #{tpu_custom_call.1} parent=51 // pred_check
          %p2181 = pneg %p213
        $region54: #{tpu_custom_call.1} parent=51 // pred_check_branch
          %2183 = sbr.rel (%p2181) target = $region56
        $region55: #{tpu_custom_call.1} parent=51 // pred_region
          %s2184 = smul.u32 2, %s22
          %2186 = vsyncadd %s2177, 0
          %s2187 = smul.addr %s2184, 2
          %s2188 = smul.addr %s2187, 8
          %s2189 = scalar_lea.hbm %s8, %s2188
          %s2190 = sshll.u32 %s2180, 4
          %s2191 = int_to_ptr.vmem [resolvable:$true] %s2190
          %s2192 = sshll.u32 %s2189, 4
          %s2193 = int_to_ptr.hbm [resolvable:$true] %s2192
          %2198 = dma.vmem_to_hbm [thread:$0]  %s2191, 512, %s2193, %s2177, 256, 256, 16
        $region56: #{tpu_custom_call.1} parent=51 // pred_fallthru
          _
      $region52: #{tpu_custom_call.1} parent=5 // pred_fallthru
        _
      %p2199 = scmp.le.s32.totalorder 2, %s17
      // Predicated region
      $region57: #{tpu_custom_call.1} parent=5 // pred_check
        %p2200 = pneg %p2199
      $region58: #{tpu_custom_call.1} parent=5 // pred_check_branch
        %2202 = sbr.rel (%p2200) target = $region60
      $region59: #{tpu_custom_call.1} parent=5 // pred_region
        %s2203 = ssub.s32 %s17, 2
        // Predicated region
        $region61: #{tpu_custom_call.1} parent=59 // pred_check
          %p2204 = pneg %p219
        $region62: #{tpu_custom_call.1} parent=59 // pred_check_branch
          %2206 = sbr.rel (%p2204) target = $region64
        $region63: #{tpu_custom_call.1} parent=59 // pred_region
          %s2207 = sand.u32 %s204, 1
          %s2208 = scalar_lea.sflag [#allocation6], %s2207
          %s2209 = sand.u32 %s204, 1
          %s2210 = smul.addr %s2209, 32
          %s2211 = scalar_lea.vmem [#allocation5], %s2210
          %2213 = dma.done %s2208, 512
        $region64: #{tpu_custom_call.1} parent=59 // pred_fallthru
          _
      $region60: #{tpu_custom_call.1} parent=5 // pred_fallthru
        _
    $region6: #{tpu_custom_call.1} parent=1 // loop_footer
      %s21 = sadd.s32 1, %s17
    $region7: #{tpu_custom_call.1} parent=1 // loop_footer_branch
      %16 = sbr.rel target = $region3
    $region8: #{tpu_custom_call.1} parent=1 // loop_exit
      _
    %2214 = vsyncpa [#allocation6], 1
    %s2215 = scalar_lea.sflag [#allocation6], 1
    %2216 = vsyncpa %s2215, 1

</llo_original>
